<compile_context>
chip_gen: v7x
topology: tpu7x:2x2x1
jax: 0.10.0
libtpu: 0.0.40
codegen_flags: <defaults>
</compile_context>

<pallas_src>
import jax
import jax.numpy as jnp
from jax import lax
from jax.experimental import pallas as pl
from jax.experimental.pallas import tpu as pltpu

EPS = 1e-5  # nn.InstanceNorm2d default eps


def _make_kernel(C_pad, H, W, HW, HWp, lane_pad, SEG, b_tile, matmul_dtype):

    def kernel(x_ref, w1_ref, b1_ref, w2_ref, b2_ref, o_ref, xs_ref, p_ref):
        # Horizontal reflect masks (col 0 / col W-1), computed once per grid step.
        col = lax.broadcasted_iota(jnp.int32, (1, HW), 1) % W
        w_first = col == 0
        w_last = col == W - 1
        inv_hw = jnp.float32(1.0 / HW)

        def build_taps(b, v):
            # v: (C_pad, HW) image b in matmul dtype.  Write the image plus its
            # vertically-reflected halo rows into the padded scratch, then copy the
            # nine 3x3 tap windows (with horizontal reflect fixups) into image b's
            # lane segment of the im2col slab.  Halo stores are widened by one lane
            # on each side so every window lane read below is well-defined.
            start = b * SEG + lane_pad
            xs_ref[:, start:start + HW] = v
            # top halo  <- row 1   (ReflectionPad2d(1)), +1 defined lane on the left
            xs_ref[:, start - W - 1:start] = v[:, W - 1:2 * W]
            # bottom halo <- row H-2,                    +1 defined lane on the right
            xs_ref[:, start + HW:start + HW + W + 1] = v[:, HW - 2 * W:HW - W + 1]

            def raw(d):  # tap window shifted by d flattened positions
                return xs_ref[:, start + d:start + d + HW]

            dst = b * HWp
            if HW != HWp:
                # keep the padded lanes of this slab segment exactly zero so the
                # matmul output there is bias-only (sliced off in the wrapper).
                p_ref[:, dst + HW:dst + HWp] = jnp.zeros(
                    (9 * C_pad, HWp - HW), matmul_dtype)

            t = 0
            for dh in (-1, 0, 1):
                base = dh * W
                a_m, a_0, a_p = raw(base - 1), raw(base), raw(base + 1)
                taps = (jnp.where(w_first, a_p, a_m),   # dw = -1, reflect at col 0
                        a_0,                            # dw =  0
                        jnp.where(w_last, a_m, a_p))    # dw = +1, reflect at col W-1
                for tap in taps:
                    p_ref[t * C_pad:(t + 1) * C_pad, dst:dst + HW] = tap
                    t += 1

        def conv(w_ref, b_ref):
            # One MXU matmul over the whole (9*C_pad, b_tile*HWp) im2col slab.
            return jnp.dot(w_ref[...], p_ref[...],
                           preferred_element_type=jnp.float32) + b_ref[...]

        def in_stats(seg):
            # Single-pass InstanceNorm statistics over the HW valid lanes (f32).
            ssum = jnp.sum(seg, axis=1, keepdims=True)
            ssq = jnp.sum(seg * seg, axis=1, keepdims=True)
            mean = ssum * inv_hw
            var = jnp.maximum(ssq * inv_hw - mean * mean, 0.0)
            return mean, lax.rsqrt(var + EPS)

        # ---- conv1: taps for all images, one wide MXU matmul -----------------
        for b in range(b_tile):
            build_taps(b, x_ref[b][:, :HW].astype(matmul_dtype))
        y1 = conv(w1_ref, b1_ref)                       # (C_pad, b_tile*HWp) f32

        # ---- InstanceNorm + ReLU per image, then conv2 taps ------------------
        for b in range(b_tile):
            seg = y1[:, b * HWp:b * HWp + HW]
            m, s = in_stats(seg)
            h = jnp.maximum((seg - m) * s, 0.0)
            build_taps(b, h.astype(matmul_dtype))
        y2 = conv(w2_ref, b2_ref)

        # ---- InstanceNorm + residual add (x re-read from its resident block) -
        for b in range(b_tile):
            m, s = in_stats(y2[:, b * HWp:b * HWp + HW])
            seg = y2[:, b * HWp:(b + 1) * HWp]          # full width, lane-dense store
            o_ref[b] = (x_ref[b] + (seg - m) * s).astype(o_ref.dtype)

    return kernel


def residual_block(x_nchw, w1, b1, w2, b2, *, b_tile=None,
                   matmul_dtype=jnp.bfloat16):
    """x_nchw: (N, C, H, W) float32. w*: (C, C, 3, 3) PyTorch OIHW, b*: (C,)."""
    N, C, H, W = x_nchw.shape
    assert H >= 2 and W >= 2, "ReflectionPad2d(1) needs H, W >= 2"
    HW = H * W
    # (8,128) alignment: channels -> sublane tile, flattened spatial -> lane tile.
    C_pad = 8 * pl.cdiv(C, 8)
    HWp = 128 * pl.cdiv(HW, 128)
    lane_pad = 128 * pl.cdiv(W + 1, 128)     # halo slack per image segment
    SEG = HWp + 2 * lane_pad                 # per-image stride in the padded scratch
    mm = jnp.dtype(matmul_dtype).itemsize
    xbytes = jnp.dtype(x_nchw.dtype).itemsize

    # ---- batch-tile choice ---------------------------------------------------
    if b_tile is None:
        per_img = (4 * C_pad * HWp * xbytes   # in + out blocks, double-buffered
                   + C_pad * SEG * mm         # padded image scratch
                   + 9 * C_pad * HWp * mm     # im2col slab
                   + 4 * C_pad * HWp * 4)     # live f32 conv outputs / temporaries
        b_tile = max(1, min(N, (16 * 1024 * 1024) // per_img))
        # Keep >= 2 grid steps when possible so the "parallel" batch axis can be
        # split across v7x's two TensorCores.
        b_tile = min(b_tile, max(1, pl.cdiv(N, 2)))
    n_pad = b_tile * pl.cdiv(N, b_tile)

    # ---- operand prep (layout / packing hoisted out of the kernel) -----------
    x = x_nchw.reshape(N, C, HW)             # free reshape, stays channel-major
    if (n_pad, C_pad, HWp) != (N, C, HW):
        x = jnp.pad(x, ((0, n_pad - N), (0, C_pad - C), (0, HWp - HW)))

    def im2col_weight(w):
        # (O, I, kh, kw) -> zero-pad channels -> (C_pad, 9*C_pad); column order
        # (kh, kw, i) matches the tap order written into the slab.
        w = jnp.pad(w.astype(jnp.float32),
                    ((0, C_pad - C), (0, C_pad - C), (0, 0), (0, 0)))
        return jnp.transpose(w, (0, 2, 3, 1)).reshape(
            C_pad, 9 * C_pad).astype(matmul_dtype)

    def pad_bias(b):
        return jnp.pad(b.astype(jnp.float32), (0, C_pad - C)).reshape(C_pad, 1)

    w1m, w2m = im2col_weight(w1), im2col_weight(w2)
    b1c, b2c = pad_bias(b1), pad_bias(b2)

    # ---- VMEM limit derived from the actual working set ----------------------
    block_bytes = b_tile * C_pad * HWp * xbytes
    weight_bytes = 2 * (C_pad * 9 * C_pad * mm + C_pad * 4)
    scratch_bytes = C_pad * b_tile * SEG * mm + 9 * C_pad * b_tile * HWp * mm
    temp_bytes = 4 * C_pad * b_tile * HWp * 4
    working = 4 * block_bytes + 2 * weight_bytes + scratch_bytes + temp_bytes
    vmem_limit = int(min(64 * 1024 * 1024, 2 * working + 8 * 1024 * 1024))

    kernel = _make_kernel(C_pad, H, W, HW, HWp, lane_pad, SEG, b_tile, matmul_dtype)

    out = pl.pallas_call(
        kernel,
        out_shape=jax.ShapeDtypeStruct((n_pad, C_pad, HWp), x_nchw.dtype),
        grid_spec=pltpu.PrefetchScalarGridSpec(
            num_scalar_prefetch=0,
            grid=(n_pad // b_tile,),
            in_specs=[
                pl.BlockSpec((b_tile, C_pad, HWp), lambda n: (n, 0, 0)),
                # Constant index_map: fetched once, VMEM-resident across the grid.
                pl.BlockSpec((C_pad, 9 * C_pad), lambda n: (0, 0)),
                pl.BlockSpec((C_pad, 1), lambda n: (0, 0)),
                pl.BlockSpec((C_pad, 9 * C_pad), lambda n: (0, 0)),
                pl.BlockSpec((C_pad, 1), lambda n: (0, 0)),
            ],
            out_specs=pl.BlockSpec((b_tile, C_pad, HWp), lambda n: (n, 0, 0)),
            scratch_shapes=[
                pltpu.VMEM((C_pad, b_tile * SEG), matmul_dtype),      # padded images
                pltpu.VMEM((9 * C_pad, b_tile * HWp), matmul_dtype),  # im2col slab
            ],
        ),
        compiler_params=pltpu.CompilerParams(
            dimension_semantics=("parallel",),
            vmem_limit_bytes=vmem_limit,
        ),
    )(x, w1m, b1c, w2m, b2c)

    return out[:N, :C, :HW].reshape(N, C, H, W)


def _reference(x_nchw, w1, b1, w2, b2):
    # Pure-JAX f32 reference mirroring the PyTorch module, for validation.
    x = jnp.transpose(x_nchw, (0, 2, 3, 1)).astype(jnp.float32)  # NHWC

    def conv(inp, w, b):
        wk = jnp.transpose(w, (2, 3, 1, 0))  # HWIO
        y = lax.conv_general_dilated(
            inp, wk, window_strides=(1, 1), padding='VALID',
            dimension_numbers=('NHWC', 'HWIO', 'NHWC'))
        return y + b[None, None, None, :]

    def inorm(y):
        m = jnp.mean(y, axis=(1, 2), keepdims=True)
        v = jnp.mean((y - m) ** 2, axis=(1, 2), keepdims=True)
        return (y - m) * lax.rsqrt(v + EPS)

    pad = lambda a: jnp.pad(a, ((0, 0), (1, 1), (1, 1), (0, 0)), mode='reflect')
    h = jnp.maximum(inorm(conv(pad(x), w1, b1)), 0.0)
    h = inorm(conv(pad(h), w2, b2))
    return jnp.transpose(x + h, (0, 3, 1, 2))


if __name__ == "__main__":
    # dim = 4; N = 4 so the batch-tiled path is exercised (b_tile = 2, grid = 2).
    N, C, H, W = 4, 4, 16, 16
    key = jax.random.PRNGKey(0)
    kx, kw1, kb1, kw2, kb2 = jax.random.split(key, 5)

    x = jax.random.normal(kx, (N, C, H, W), dtype=jnp.float32)
    # deterministic synthetic parameters (shapes from nn.Conv2d(dim, dim, 3))
    w1 = 0.1 * jax.random.normal(kw1, (C, C, 3, 3), dtype=jnp.float32)
    b1 = 0.1 * jax.random.normal(kb1, (C,), dtype=jnp.float32)
    w2 = 0.1 * jax.random.normal(kw2, (C, C, 3, 3), dtype=jnp.float32)
    b2 = 0.1 * jax.random.normal(kb2, (C,), dtype=jnp.float32)

    run = jax.jit(residual_block)
    out = jax.block_until_ready(run(x, w1, b1, w2, b2))

    ref = _reference(x, w1, b1, w2, b2)
    assert out.shape == (N, C, H, W)
    # bf16 MXU inputs (f32 accumulation) vs. the pure-f32 reference -> relaxed tol.
    err = float(jnp.max(jnp.abs(out - ref)))
    assert jnp.allclose(out, ref, atol=5e-2, rtol=5e-2), err

    print("KERNEL_OK")
</pallas_src>

<mosaic_0001>
module attributes {stable_mosaic.version = 11 : i64} {
  func.func @kernel(%arg0: i32, %arg1: memref<2x8x256xf32, #tpu.memory_space<vmem>>, %arg2: memref<8x72xbf16, #tpu.memory_space<vmem>>, %arg3: memref<8x1xf32, #tpu.memory_space<vmem>>, %arg4: memref<8x72xbf16, #tpu.memory_space<vmem>>, %arg5: memref<8x1xf32, #tpu.memory_space<vmem>>, %arg6: memref<2x8x256xf32, #tpu.memory_space<vmem>>, %arg7: memref<8x1024xbf16, #tpu.memory_space<vmem>>, %arg8: memref<72x512xbf16, #tpu.memory_space<vmem>>) attributes {dimension_semantics = [#tpu.dimension_semantics<parallel>], iteration_bounds = array<i64: 2>, scalar_prefetch = 0 : i64, scratch_operands = 2 : i64, tpu.core_type = #tpu.core_type<tc>, window_params = [{transform_indices = @transform_0, window_bounds = array<i64: 2, 8, 256>}, {pipeline_mode = #tpu.pipeline_mode<synchronous>, transform_indices = @transform_1, window_bounds = array<i64: 8, 72>}, {pipeline_mode = #tpu.pipeline_mode<synchronous>, transform_indices = @transform_2, window_bounds = array<i64: 8, 1>}, {pipeline_mode = #tpu.pipeline_mode<synchronous>, transform_indices = @transform_3, window_bounds = array<i64: 8, 72>}, {pipeline_mode = #tpu.pipeline_mode<synchronous>, transform_indices = @transform_4, window_bounds = array<i64: 8, 1>}, {transform_indices = @transform_5, window_bounds = array<i64: 2, 8, 256>}]} {
    %0 = tpu.iota {dimensions = array<i32: 1>} : vector<1x256xi32>
    %c16_i32 = arith.constant 16 : i32
    %c0_i32 = arith.constant 0 : i32
    %1 = arith.cmpi eq, %c16_i32, %c0_i32 : i32
    %c1_i32 = arith.constant 1 : i32
    %2 = arith.select %1, %c1_i32, %c16_i32 : i32
    %3 = vector.broadcast %2 : i32 to vector<1x256xi32>
    %4 = arith.remsi %0, %3 : vector<1x256xi32>
    %c0_i32_0 = arith.constant 0 : i32
    %5 = vector.broadcast %c0_i32_0 : i32 to vector<1x256xi32>
    %6 = arith.cmpi ne, %4, %5 : vector<1x256xi32>
    %c0_i32_1 = arith.constant 0 : i32
    %7 = vector.broadcast %c0_i32_1 : i32 to vector<1x256xi32>
    %8 = arith.cmpi slt, %4, %7 : vector<1x256xi32>
    %c0_i32_2 = arith.constant 0 : i32
    %9 = arith.cmpi slt, %2, %c0_i32_2 : i32
    %10 = vector.broadcast %9 : i1 to vector<1x256xi1>
    %11 = vector.broadcast %10 : vector<1x256xi1> to vector<1x256xi1>
    %12 = arith.xori %8, %11 : vector<1x256xi1>
    %13 = arith.andi %12, %6 : vector<1x256xi1>
    %14 = vector.broadcast %2 : i32 to vector<1x256xi32>
    %15 = arith.addi %4, %14 : vector<1x256xi32>
    %16 = arith.select %13, %15, %4 : vector<1x256xi1>, vector<1x256xi32>
    %c0_i32_3 = arith.constant 0 : i32
    %17 = vector.broadcast %c0_i32_3 : i32 to vector<1x256xi32>
    %18 = arith.cmpi eq, %16, %17 : vector<1x256xi32>
    %c15_i32 = arith.constant 15 : i32
    %19 = vector.broadcast %c15_i32 : i32 to vector<1x256xi32>
    %20 = arith.cmpi eq, %16, %19 : vector<1x256xi32>
    %c0 = arith.constant 0 : index
    %c0_4 = arith.constant 0 : index
    %c0_5 = arith.constant 0 : index
    %21 = vector.load %arg1[%c0, %c0_4, %c0_5] : memref<2x8x256xf32, #tpu.memory_space<vmem>>, vector<1x8x256xf32>
    %22 = vector.shape_cast %21 : vector<1x8x256xf32> to vector<8x256xf32>
    %23 = arith.truncf %22 : vector<8x256xf32> to vector<8x256xbf16>
    %c0_6 = arith.constant 0 : index
    %c128 = arith.constant 128 : index
    %24 = vector.load %arg7[%c0_6, %c128] : memref<8x1024xbf16, #tpu.memory_space<vmem>>, vector<8x256xbf16>
    tpu.vector_store %arg7[%c0_6, %c128], %23 {strides = array<i32>} : memref<8x1024xbf16, #tpu.memory_space<vmem>>, vector<8x256xbf16>,
    %25 = vector.extract_strided_slice %23 {offsets = [0, 15], sizes = [8, 17], strides = [1, 1]} : vector<8x256xbf16> to vector<8x17xbf16>
    %c0_7 = arith.constant 0 : index
    %c111 = arith.constant 111 : index
    %26 = vector.load %arg7[%c0_7, %c111] : memref<8x1024xbf16, #tpu.memory_space<vmem>>, vector<8x17xbf16>
    tpu.vector_store %arg7[%c0_7, %c111], %25 {strides = array<i32>} : memref<8x1024xbf16, #tpu.memory_space<vmem>>, vector<8x17xbf16>,
    %27 = vector.extract_strided_slice %23 {offsets = [0, 224], sizes = [8, 17], strides = [1, 1]} : vector<8x256xbf16> to vector<8x17xbf16>
    %c0_8 = arith.constant 0 : index
    %c384 = arith.constant 384 : index
    %28 = vector.load %arg7[%c0_8, %c384] : memref<8x1024xbf16, #tpu.memory_space<vmem>>, vector<8x17xbf16>
    tpu.vector_store %arg7[%c0_8, %c384], %27 {strides = array<i32>} : memref<8x1024xbf16, #tpu.memory_space<vmem>>, vector<8x17xbf16>,
    %c0_9 = arith.constant 0 : index
    %c111_10 = arith.constant 111 : index
    %29 = vector.load %arg7[%c0_9, %c111_10] : memref<8x1024xbf16, #tpu.memory_space<vmem>>, vector<8x256xbf16>
    %c0_11 = arith.constant 0 : index
    %c112 = arith.constant 112 : index
    %30 = vector.load %arg7[%c0_11, %c112] : memref<8x1024xbf16, #tpu.memory_space<vmem>>, vector<8x256xbf16>
    %c0_12 = arith.constant 0 : index
    %c113 = arith.constant 113 : index
    %31 = vector.load %arg7[%c0_12, %c113] : memref<8x1024xbf16, #tpu.memory_space<vmem>>, vector<8x256xbf16>
    %32 = vector.shape_cast %18 : vector<1x256xi1> to vector<1x256xi1>
    %33 = vector.broadcast %32 : vector<1x256xi1> to vector<8x256xi1>
    %34 = arith.select %33, %31, %29 : vector<8x256xi1>, vector<8x256xbf16>
    %35 = vector.shape_cast %20 : vector<1x256xi1> to vector<1x256xi1>
    %36 = vector.broadcast %35 : vector<1x256xi1> to vector<8x256xi1>
    %37 = arith.select %36, %29, %31 : vector<8x256xi1>, vector<8x256xbf16>
    %c0_13 = arith.constant 0 : index
    %c0_14 = arith.constant 0 : index
    %38 = vector.load %arg8[%c0_13, %c0_14] : memref<72x512xbf16, #tpu.memory_space<vmem>>, vector<8x256xbf16>
    tpu.vector_store %arg8[%c0_13, %c0_14], %34 {strides = array<i32>} : memref<72x512xbf16, #tpu.memory_space<vmem>>, vector<8x256xbf16>,
    %c8 = arith.constant 8 : index
    %c0_15 = arith.constant 0 : index
    %39 = vector.load %arg8[%c8, %c0_15] : memref<72x512xbf16, #tpu.memory_space<vmem>>, vector<8x256xbf16>
    tpu.vector_store %arg8[%c8, %c0_15], %30 {strides = array<i32>} : memref<72x512xbf16, #tpu.memory_space<vmem>>, vector<8x256xbf16>,
    %c16 = arith.constant 16 : index
    %c0_16 = arith.constant 0 : index
    %40 = vector.load %arg8[%c16, %c0_16] : memref<72x512xbf16, #tpu.memory_space<vmem>>, vector<8x256xbf16>
    tpu.vector_store %arg8[%c16, %c0_16], %37 {strides = array<i32>} : memref<72x512xbf16, #tpu.memory_space<vmem>>, vector<8x256xbf16>,
    %c0_17 = arith.constant 0 : index
    %c127 = arith.constant 127 : index
    %41 = vector.load %arg7[%c0_17, %c127] : memref<8x1024xbf16, #tpu.memory_space<vmem>>, vector<8x256xbf16>
    %c0_18 = arith.constant 0 : index
    %c128_19 = arith.constant 128 : index
    %42 = vector.load %arg7[%c0_18, %c128_19] : memref<8x1024xbf16, #tpu.memory_space<vmem>>, vector<8x256xbf16>
    %c0_20 = arith.constant 0 : index
    %c129 = arith.constant 129 : index
    %43 = vector.load %arg7[%c0_20, %c129] : memref<8x1024xbf16, #tpu.memory_space<vmem>>, vector<8x256xbf16>
    %44 = vector.shape_cast %18 : vector<1x256xi1> to vector<1x256xi1>
    %45 = vector.broadcast %44 : vector<1x256xi1> to vector<8x256xi1>
    %46 = arith.select %45, %43, %41 : vector<8x256xi1>, vector<8x256xbf16>
    %47 = vector.shape_cast %20 : vector<1x256xi1> to vector<1x256xi1>
    %48 = vector.broadcast %47 : vector<1x256xi1> to vector<8x256xi1>
    %49 = arith.select %48, %41, %43 : vector<8x256xi1>, vector<8x256xbf16>
    %c24 = arith.constant 24 : index
    %c0_21 = arith.constant 0 : index
    %50 = vector.load %arg8[%c24, %c0_21] : memref<72x512xbf16, #tpu.memory_space<vmem>>, vector<8x256xbf16>
    tpu.vector_store %arg8[%c24, %c0_21], %46 {strides = array<i32>} : memref<72x512xbf16, #tpu.memory_space<vmem>>, vector<8x256xbf16>,
    %c32 = arith.constant 32 : index
    %c0_22 = arith.constant 0 : index
    %51 = vector.load %arg8[%c32, %c0_22] : memref<72x512xbf16, #tpu.memory_space<vmem>>, vector<8x256xbf16>
    tpu.vector_store %arg8[%c32, %c0_22], %42 {strides = array<i32>} : memref<72x512xbf16, #tpu.memory_space<vmem>>, vector<8x256xbf16>,
    %c40 = arith.constant 40 : index
    %c0_23 = arith.constant 0 : index
    %52 = vector.load %arg8[%c40, %c0_23] : memref<72x512xbf16, #tpu.memory_space<vmem>>, vector<8x256xbf16>
    tpu.vector_store %arg8[%c40, %c0_23], %49 {strides = array<i32>} : memref<72x512xbf16, #tpu.memory_space<vmem>>, vector<8x256xbf16>,
    %c0_24 = arith.constant 0 : index
    %c143 = arith.constant 143 : index
    %53 = vector.load %arg7[%c0_24, %c143] : memref<8x1024xbf16, #tpu.memory_space<vmem>>, vector<8x256xbf16>
    %c0_25 = arith.constant 0 : index
    %c144 = arith.constant 144 : index
    %54 = vector.load %arg7[%c0_25, %c144] : memref<8x1024xbf16, #tpu.memory_space<vmem>>, vector<8x256xbf16>
    %c0_26 = arith.constant 0 : index
    %c145 = arith.constant 145 : index
    %55 = vector.load %arg7[%c0_26, %c145] : memref<8x1024xbf16, #tpu.memory_space<vmem>>, vector<8x256xbf16>
    %56 = vector.shape_cast %18 : vector<1x256xi1> to vector<1x256xi1>
    %57 = vector.broadcast %56 : vector<1x256xi1> to vector<8x256xi1>
    %58 = arith.select %57, %55, %53 : vector<8x256xi1>, vector<8x256xbf16>
    %59 = vector.shape_cast %20 : vector<1x256xi1> to vector<1x256xi1>
    %60 = vector.broadcast %59 : vector<1x256xi1> to vector<8x256xi1>
    %61 = arith.select %60, %53, %55 : vector<8x256xi1>, vector<8x256xbf16>
    %c48 = arith.constant 48 : index
    %c0_27 = arith.constant 0 : index
    %62 = vector.load %arg8[%c48, %c0_27] : memref<72x512xbf16, #tpu.memory_space<vmem>>, vector<8x256xbf16>
    tpu.vector_store %arg8[%c48, %c0_27], %58 {strides = array<i32>} : memref<72x512xbf16, #tpu.memory_space<vmem>>, vector<8x256xbf16>,
    %c56 = arith.constant 56 : index
    %c0_28 = arith.constant 0 : index
    %63 = vector.load %arg8[%c56, %c0_28] : memref<72x512xbf16, #tpu.memory_space<vmem>>, vector<8x256xbf16>
    tpu.vector_store %arg8[%c56, %c0_28], %54 {strides = array<i32>} : memref<72x512xbf16, #tpu.memory_space<vmem>>, vector<8x256xbf16>,
    %c64 = arith.constant 64 : index
    %c0_29 = arith.constant 0 : index
    %64 = vector.load %arg8[%c64, %c0_29] : memref<72x512xbf16, #tpu.memory_space<vmem>>, vector<8x256xbf16>
    tpu.vector_store %arg8[%c64, %c0_29], %61 {strides = array<i32>} : memref<72x512xbf16, #tpu.memory_space<vmem>>, vector<8x256xbf16>,
    %c1 = arith.constant 1 : index
    %c0_30 = arith.constant 0 : index
    %c0_31 = arith.constant 0 : index
    %65 = vector.load %arg1[%c1, %c0_30, %c0_31] : memref<2x8x256xf32, #tpu.memory_space<vmem>>, vector<1x8x256xf32>
    %66 = vector.shape_cast %65 : vector<1x8x256xf32> to vector<8x256xf32>
    %67 = arith.truncf %66 : vector<8x256xf32> to vector<8x256xbf16>
    %c0_32 = arith.constant 0 : index
    %c640 = arith.constant 640 : index
    %68 = vector.load %arg7[%c0_32, %c640] : memref<8x1024xbf16, #tpu.memory_space<vmem>>, vector<8x256xbf16>
    tpu.vector_store %arg7[%c0_32, %c640], %67 {strides = array<i32>} : memref<8x1024xbf16, #tpu.memory_space<vmem>>, vector<8x256xbf16>,
    %69 = vector.extract_strided_slice %67 {offsets = [0, 15], sizes = [8, 17], strides = [1, 1]} : vector<8x256xbf16> to vector<8x17xbf16>
    %c0_33 = arith.constant 0 : index
    %c623 = arith.constant 623 : index
    %70 = vector.load %arg7[%c0_33, %c623] : memref<8x1024xbf16, #tpu.memory_space<vmem>>, vector<8x17xbf16>
    tpu.vector_store %arg7[%c0_33, %c623], %69 {strides = array<i32>} : memref<8x1024xbf16, #tpu.memory_space<vmem>>, vector<8x17xbf16>,
    %71 = vector.extract_strided_slice %67 {offsets = [0, 224], sizes = [8, 17], strides = [1, 1]} : vector<8x256xbf16> to vector<8x17xbf16>
    %c0_34 = arith.constant 0 : index
    %c896 = arith.constant 896 : index
    %72 = vector.load %arg7[%c0_34, %c896] : memref<8x1024xbf16, #tpu.memory_space<vmem>>, vector<8x17xbf16>
    tpu.vector_store %arg7[%c0_34, %c896], %71 {strides = array<i32>} : memref<8x1024xbf16, #tpu.memory_space<vmem>>, vector<8x17xbf16>,
    %c0_35 = arith.constant 0 : index
    %c623_36 = arith.constant 623 : index
    %73 = vector.load %arg7[%c0_35, %c623_36] : memref<8x1024xbf16, #tpu.memory_space<vmem>>, vector<8x256xbf16>
    %c0_37 = arith.constant 0 : index
    %c624 = arith.constant 624 : index
    %74 = vector.load %arg7[%c0_37, %c624] : memref<8x1024xbf16, #tpu.memory_space<vmem>>, vector<8x256xbf16>
    %c0_38 = arith.constant 0 : index
    %c625 = arith.constant 625 : index
    %75 = vector.load %arg7[%c0_38, %c625] : memref<8x1024xbf16, #tpu.memory_space<vmem>>, vector<8x256xbf16>
    %76 = vector.shape_cast %18 : vector<1x256xi1> to vector<1x256xi1>
    %77 = vector.broadcast %76 : vector<1x256xi1> to vector<8x256xi1>
    %78 = arith.select %77, %75, %73 : vector<8x256xi1>, vector<8x256xbf16>
    %79 = vector.shape_cast %20 : vector<1x256xi1> to vector<1x256xi1>
    %80 = vector.broadcast %79 : vector<1x256xi1> to vector<8x256xi1>
    %81 = arith.select %80, %73, %75 : vector<8x256xi1>, vector<8x256xbf16>
    %c0_39 = arith.constant 0 : index
    %c256 = arith.constant 256 : index
    %82 = vector.load %arg8[%c0_39, %c256] : memref<72x512xbf16, #tpu.memory_space<vmem>>, vector<8x256xbf16>
    tpu.vector_store %arg8[%c0_39, %c256], %78 {strides = array<i32>} : memref<72x512xbf16, #tpu.memory_space<vmem>>, vector<8x256xbf16>,
    %c8_40 = arith.constant 8 : index
    %c256_41 = arith.constant 256 : index
    %83 = vector.load %arg8[%c8_40, %c256_41] : memref<72x512xbf16, #tpu.memory_space<vmem>>, vector<8x256xbf16>
    tpu.vector_store %arg8[%c8_40, %c256_41], %74 {strides = array<i32>} : memref<72x512xbf16, #tpu.memory_space<vmem>>, vector<8x256xbf16>,
    %c16_42 = arith.constant 16 : index
    %c256_43 = arith.constant 256 : index
    %84 = vector.load %arg8[%c16_42, %c256_43] : memref<72x512xbf16, #tpu.memory_space<vmem>>, vector<8x256xbf16>
    tpu.vector_store %arg8[%c16_42, %c256_43], %81 {strides = array<i32>} : memref<72x512xbf16, #tpu.memory_space<vmem>>, vector<8x256xbf16>,
    %c0_44 = arith.constant 0 : index
    %c639 = arith.constant 639 : index
    %85 = vector.load %arg7[%c0_44, %c639] : memref<8x1024xbf16, #tpu.memory_space<vmem>>, vector<8x256xbf16>
    %c0_45 = arith.constant 0 : index
    %c640_46 = arith.constant 640 : index
    %86 = vector.load %arg7[%c0_45, %c640_46] : memref<8x1024xbf16, #tpu.memory_space<vmem>>, vector<8x256xbf16>
    %c0_47 = arith.constant 0 : index
    %c641 = arith.constant 641 : index
    %87 = vector.load %arg7[%c0_47, %c641] : memref<8x1024xbf16, #tpu.memory_space<vmem>>, vector<8x256xbf16>
    %88 = vector.shape_cast %18 : vector<1x256xi1> to vector<1x256xi1>
    %89 = vector.broadcast %88 : vector<1x256xi1> to vector<8x256xi1>
    %90 = arith.select %89, %87, %85 : vector<8x256xi1>, vector<8x256xbf16>
    %91 = vector.shape_cast %20 : vector<1x256xi1> to vector<1x256xi1>
    %92 = vector.broadcast %91 : vector<1x256xi1> to vector<8x256xi1>
    %93 = arith.select %92, %85, %87 : vector<8x256xi1>, vector<8x256xbf16>
    %c24_48 = arith.constant 24 : index
    %c256_49 = arith.constant 256 : index
    %94 = vector.load %arg8[%c24_48, %c256_49] : memref<72x512xbf16, #tpu.memory_space<vmem>>, vector<8x256xbf16>
    tpu.vector_store %arg8[%c24_48, %c256_49], %90 {strides = array<i32>} : memref<72x512xbf16, #tpu.memory_space<vmem>>, vector<8x256xbf16>,
    %c32_50 = arith.constant 32 : index
    %c256_51 = arith.constant 256 : index
    %95 = vector.load %arg8[%c32_50, %c256_51] : memref<72x512xbf16, #tpu.memory_space<vmem>>, vector<8x256xbf16>
    tpu.vector_store %arg8[%c32_50, %c256_51], %86 {strides = array<i32>} : memref<72x512xbf16, #tpu.memory_space<vmem>>, vector<8x256xbf16>,
    %c40_52 = arith.constant 40 : index
    %c256_53 = arith.constant 256 : index
    %96 = vector.load %arg8[%c40_52, %c256_53] : memref<72x512xbf16, #tpu.memory_space<vmem>>, vector<8x256xbf16>
    tpu.vector_store %arg8[%c40_52, %c256_53], %93 {strides = array<i32>} : memref<72x512xbf16, #tpu.memory_space<vmem>>, vector<8x256xbf16>,
    %c0_54 = arith.constant 0 : index
    %c655 = arith.constant 655 : index
    %97 = vector.load %arg7[%c0_54, %c655] : memref<8x1024xbf16, #tpu.memory_space<vmem>>, vector<8x256xbf16>
    %c0_55 = arith.constant 0 : index
    %c656 = arith.constant 656 : index
    %98 = vector.load %arg7[%c0_55, %c656] : memref<8x1024xbf16, #tpu.memory_space<vmem>>, vector<8x256xbf16>
    %c0_56 = arith.constant 0 : index
    %c657 = arith.constant 657 : index
    %99 = vector.load %arg7[%c0_56, %c657] : memref<8x1024xbf16, #tpu.memory_space<vmem>>, vector<8x256xbf16>
    %100 = vector.shape_cast %18 : vector<1x256xi1> to vector<1x256xi1>
    %101 = vector.broadcast %100 : vector<1x256xi1> to vector<8x256xi1>
    %102 = arith.select %101, %99, %97 : vector<8x256xi1>, vector<8x256xbf16>
    %103 = vector.shape_cast %20 : vector<1x256xi1> to vector<1x256xi1>
    %104 = vector.broadcast %103 : vector<1x256xi1> to vector<8x256xi1>
    %105 = arith.select %104, %97, %99 : vector<8x256xi1>, vector<8x256xbf16>
    %c48_57 = arith.constant 48 : index
    %c256_58 = arith.constant 256 : index
    %106 = vector.load %arg8[%c48_57, %c256_58] : memref<72x512xbf16, #tpu.memory_space<vmem>>, vector<8x256xbf16>
    tpu.vector_store %arg8[%c48_57, %c256_58], %102 {strides = array<i32>} : memref<72x512xbf16, #tpu.memory_space<vmem>>, vector<8x256xbf16>,
    %c56_59 = arith.constant 56 : index
    %c256_60 = arith.constant 256 : index
    %107 = vector.load %arg8[%c56_59, %c256_60] : memref<72x512xbf16, #tpu.memory_space<vmem>>, vector<8x256xbf16>
    tpu.vector_store %arg8[%c56_59, %c256_60], %98 {strides = array<i32>} : memref<72x512xbf16, #tpu.memory_space<vmem>>, vector<8x256xbf16>,
    %c64_61 = arith.constant 64 : index
    %c256_62 = arith.constant 256 : index
    %108 = vector.load %arg8[%c64_61, %c256_62] : memref<72x512xbf16, #tpu.memory_space<vmem>>, vector<8x256xbf16>
    tpu.vector_store %arg8[%c64_61, %c256_62], %105 {strides = array<i32>} : memref<72x512xbf16, #tpu.memory_space<vmem>>, vector<8x256xbf16>,
    %c0_63 = arith.constant 0 : index
    %c0_64 = arith.constant 0 : index
    %109 = vector.load %arg2[%c0_63, %c0_64] : memref<8x72xbf16, #tpu.memory_space<vmem>>, vector<8x72xbf16>
    %c0_65 = arith.constant 0 : index
    %c0_66 = arith.constant 0 : index
    %110 = vector.load %arg8[%c0_65, %c0_66] : memref<72x512xbf16, #tpu.memory_space<vmem>>, vector<72x512xbf16>
    %cst = arith.constant dense<0.000000e+00> : vector<8x512xf32>
    %111 = tpu.matmul %109, %110, %cst {dimension_numbers = #tpu.dot_dimension_numbers<[1], [0], [0], [1], [0, 0, 1, 1], [], []>} : vector<8x72xbf16>, vector<72x512xbf16>, vector<8x512xf32> -> vector<8x512xf32>
    %c0_67 = arith.constant 0 : index
    %c0_68 = arith.constant 0 : index
    %112 = vector.load %arg3[%c0_67, %c0_68] : memref<8x1xf32, #tpu.memory_space<vmem>>, vector<8x1xf32>
    %113 = vector.broadcast %112 : vector<8x1xf32> to vector<8x512xf32>
    %114 = arith.addf %111, %113 : vector<8x512xf32>
    %115 = vector.extract_strided_slice %114 {offsets = [0, 0], sizes = [8, 256], strides = [1, 1]} : vector<8x512xf32> to vector<8x256xf32>
    %cst_69 = arith.constant dense<0.000000e+00> : vector<8xf32>
    %116 = vector.multi_reduction <add>, %115, %cst_69 [1] : vector<8x256xf32> to vector<8xf32>
    %117 = vector.shape_cast %116 : vector<8xf32> to vector<8x1xf32>
    %118 = arith.mulf %115, %115 : vector<8x256xf32>
    %cst_70 = arith.constant dense<0.000000e+00> : vector<8xf32>
    %119 = vector.multi_reduction <add>, %118, %cst_70 [1] : vector<8x256xf32> to vector<8xf32>
    %120 = vector.shape_cast %119 : vector<8xf32> to vector<8x1xf32>
    %cst_71 = arith.constant 3.906250e-03 : f32
    %121 = vector.broadcast %cst_71 : f32 to vector<8x1xf32>
    %122 = arith.mulf %117, %121 : vector<8x1xf32>
    %cst_72 = arith.constant 3.906250e-03 : f32
    %123 = vector.broadcast %cst_72 : f32 to vector<8x1xf32>
    %124 = arith.mulf %120, %123 : vector<8x1xf32>
    %125 = arith.mulf %122, %122 : vector<8x1xf32>
    %126 = arith.subf %124, %125 : vector<8x1xf32>
    %cst_73 = arith.constant 0.000000e+00 : f32
    %127 = vector.broadcast %cst_73 : f32 to vector<8x1xf32>
    %128 = arith.maximumf %126, %127 : vector<8x1xf32>
    %cst_74 = arith.constant 9.99999974E-6 : f32
    %129 = vector.broadcast %cst_74 : f32 to vector<8x1xf32>
    %130 = arith.addf %128, %129 : vector<8x1xf32>
    %131 = math.rsqrt %130 : vector<8x1xf32>
    %132 = vector.broadcast %122 : vector<8x1xf32> to vector<8x256xf32>
    %133 = arith.subf %115, %132 : vector<8x256xf32>
    %134 = vector.broadcast %131 : vector<8x1xf32> to vector<8x256xf32>
    %135 = arith.mulf %133, %134 : vector<8x256xf32>
    %cst_75 = arith.constant 0.000000e+00 : f32
    %136 = vector.broadcast %cst_75 : f32 to vector<8x256xf32>
    %137 = arith.maximumf %135, %136 : vector<8x256xf32>
    %138 = arith.truncf %137 : vector<8x256xf32> to vector<8x256xbf16>
    %c0_76 = arith.constant 0 : index
    %c128_77 = arith.constant 128 : index
    %139 = vector.load %arg7[%c0_76, %c128_77] : memref<8x1024xbf16, #tpu.memory_space<vmem>>, vector<8x256xbf16>
    tpu.vector_store %arg7[%c0_76, %c128_77], %138 {strides = array<i32>} : memref<8x1024xbf16, #tpu.memory_space<vmem>>, vector<8x256xbf16>,
    %140 = vector.extract_strided_slice %138 {offsets = [0, 15], sizes = [8, 17], strides = [1, 1]} : vector<8x256xbf16> to vector<8x17xbf16>
    %c0_78 = arith.constant 0 : index
    %c111_79 = arith.constant 111 : index
    %141 = vector.load %arg7[%c0_78, %c111_79] : memref<8x1024xbf16, #tpu.memory_space<vmem>>, vector<8x17xbf16>
    tpu.vector_store %arg7[%c0_78, %c111_79], %140 {strides = array<i32>} : memref<8x1024xbf16, #tpu.memory_space<vmem>>, vector<8x17xbf16>,
    %142 = vector.extract_strided_slice %138 {offsets = [0, 224], sizes = [8, 17], strides = [1, 1]} : vector<8x256xbf16> to vector<8x17xbf16>
    %c0_80 = arith.constant 0 : index
    %c384_81 = arith.constant 384 : index
    %143 = vector.load %arg7[%c0_80, %c384_81] : memref<8x1024xbf16, #tpu.memory_space<vmem>>, vector<8x17xbf16>
    tpu.vector_store %arg7[%c0_80, %c384_81], %142 {strides = array<i32>} : memref<8x1024xbf16, #tpu.memory_space<vmem>>, vector<8x17xbf16>,
    %c0_82 = arith.constant 0 : index
    %c111_83 = arith.constant 111 : index
    %144 = vector.load %arg7[%c0_82, %c111_83] : memref<8x1024xbf16, #tpu.memory_space<vmem>>, vector<8x256xbf16>
    %c0_84 = arith.constant 0 : index
    %c112_85 = arith.constant 112 : index
    %145 = vector.load %arg7[%c0_84, %c112_85] : memref<8x1024xbf16, #tpu.memory_space<vmem>>, vector<8x256xbf16>
    %c0_86 = arith.constant 0 : index
    %c113_87 = arith.constant 113 : index
    %146 = vector.load %arg7[%c0_86, %c113_87] : memref<8x1024xbf16, #tpu.memory_space<vmem>>, vector<8x256xbf16>
    %147 = vector.shape_cast %18 : vector<1x256xi1> to vector<1x256xi1>
    %148 = vector.broadcast %147 : vector<1x256xi1> to vector<8x256xi1>
    %149 = arith.select %148, %146, %144 : vector<8x256xi1>, vector<8x256xbf16>
    %150 = vector.shape_cast %20 : vector<1x256xi1> to vector<1x256xi1>
    %151 = vector.broadcast %150 : vector<1x256xi1> to vector<8x256xi1>
    %152 = arith.select %151, %144, %146 : vector<8x256xi1>, vector<8x256xbf16>
    %c0_88 = arith.constant 0 : index
    %c0_89 = arith.constant 0 : index
    %153 = vector.load %arg8[%c0_88, %c0_89] : memref<72x512xbf16, #tpu.memory_space<vmem>>, vector<8x256xbf16>
    tpu.vector_store %arg8[%c0_88, %c0_89], %149 {strides = array<i32>} : memref<72x512xbf16, #tpu.memory_space<vmem>>, vector<8x256xbf16>,
    %c8_90 = arith.constant 8 : index
    %c0_91 = arith.constant 0 : index
    %154 = vector.load %arg8[%c8_90, %c0_91] : memref<72x512xbf16, #tpu.memory_space<vmem>>, vector<8x256xbf16>
    tpu.vector_store %arg8[%c8_90, %c0_91], %145 {strides = array<i32>} : memref<72x512xbf16, #tpu.memory_space<vmem>>, vector<8x256xbf16>,
    %c16_92 = arith.constant 16 : index
    %c0_93 = arith.constant 0 : index
    %155 = vector.load %arg8[%c16_92, %c0_93] : memref<72x512xbf16, #tpu.memory_space<vmem>>, vector<8x256xbf16>
    tpu.vector_store %arg8[%c16_92, %c0_93], %152 {strides = array<i32>} : memref<72x512xbf16, #tpu.memory_space<vmem>>, vector<8x256xbf16>,
    %c0_94 = arith.constant 0 : index
    %c127_95 = arith.constant 127 : index
    %156 = vector.load %arg7[%c0_94, %c127_95] : memref<8x1024xbf16, #tpu.memory_space<vmem>>, vector<8x256xbf16>
    %c0_96 = arith.constant 0 : index
    %c128_97 = arith.constant 128 : index
    %157 = vector.load %arg7[%c0_96, %c128_97] : memref<8x1024xbf16, #tpu.memory_space<vmem>>, vector<8x256xbf16>
    %c0_98 = arith.constant 0 : index
    %c129_99 = arith.constant 129 : index
    %158 = vector.load %arg7[%c0_98, %c129_99] : memref<8x1024xbf16, #tpu.memory_space<vmem>>, vector<8x256xbf16>
    %159 = vector.shape_cast %18 : vector<1x256xi1> to vector<1x256xi1>
    %160 = vector.broadcast %159 : vector<1x256xi1> to vector<8x256xi1>
    %161 = arith.select %160, %158, %156 : vector<8x256xi1>, vector<8x256xbf16>
    %162 = vector.shape_cast %20 : vector<1x256xi1> to vector<1x256xi1>
    %163 = vector.broadcast %162 : vector<1x256xi1> to vector<8x256xi1>
    %164 = arith.select %163, %156, %158 : vector<8x256xi1>, vector<8x256xbf16>
    %c24_100 = arith.constant 24 : index
    %c0_101 = arith.constant 0 : index
    %165 = vector.load %arg8[%c24_100, %c0_101] : memref<72x512xbf16, #tpu.memory_space<vmem>>, vector<8x256xbf16>
    tpu.vector_store %arg8[%c24_100, %c0_101], %161 {strides = array<i32>} : memref<72x512xbf16, #tpu.memory_space<vmem>>, vector<8x256xbf16>,
    %c32_102 = arith.constant 32 : index
    %c0_103 = arith.constant 0 : index
    %166 = vector.load %arg8[%c32_102, %c0_103] : memref<72x512xbf16, #tpu.memory_space<vmem>>, vector<8x256xbf16>
    tpu.vector_store %arg8[%c32_102, %c0_103], %157 {strides = array<i32>} : memref<72x512xbf16, #tpu.memory_space<vmem>>, vector<8x256xbf16>,
    %c40_104 = arith.constant 40 : index
    %c0_105 = arith.constant 0 : index
    %167 = vector.load %arg8[%c40_104, %c0_105] : memref<72x512xbf16, #tpu.memory_space<vmem>>, vector<8x256xbf16>
    tpu.vector_store %arg8[%c40_104, %c0_105], %164 {strides = array<i32>} : memref<72x512xbf16, #tpu.memory_space<vmem>>, vector<8x256xbf16>,
    %c0_106 = arith.constant 0 : index
    %c143_107 = arith.constant 143 : index
    %168 = vector.load %arg7[%c0_106, %c143_107] : memref<8x1024xbf16, #tpu.memory_space<vmem>>, vector<8x256xbf16>
    %c0_108 = arith.constant 0 : index
    %c144_109 = arith.constant 144 : index
    %169 = vector.load %arg7[%c0_108, %c144_109] : memref<8x1024xbf16, #tpu.memory_space<vmem>>, vector<8x256xbf16>
    %c0_110 = arith.constant 0 : index
    %c145_111 = arith.constant 145 : index
    %170 = vector.load %arg7[%c0_110, %c145_111] : memref<8x1024xbf16, #tpu.memory_space<vmem>>, vector<8x256xbf16>
    %171 = vector.shape_cast %18 : vector<1x256xi1> to vector<1x256xi1>
    %172 = vector.broadcast %171 : vector<1x256xi1> to vector<8x256xi1>
    %173 = arith.select %172, %170, %168 : vector<8x256xi1>, vector<8x256xbf16>
    %174 = vector.shape_cast %20 : vector<1x256xi1> to vector<1x256xi1>
    %175 = vector.broadcast %174 : vector<1x256xi1> to vector<8x256xi1>
    %176 = arith.select %175, %168, %170 : vector<8x256xi1>, vector<8x256xbf16>
    %c48_112 = arith.constant 48 : index
    %c0_113 = arith.constant 0 : index
    %177 = vector.load %arg8[%c48_112, %c0_113] : memref<72x512xbf16, #tpu.memory_space<vmem>>, vector<8x256xbf16>
    tpu.vector_store %arg8[%c48_112, %c0_113], %173 {strides = array<i32>} : memref<72x512xbf16, #tpu.memory_space<vmem>>, vector<8x256xbf16>,
    %c56_114 = arith.constant 56 : index
    %c0_115 = arith.constant 0 : index
    %178 = vector.load %arg8[%c56_114, %c0_115] : memref<72x512xbf16, #tpu.memory_space<vmem>>, vector<8x256xbf16>
    tpu.vector_store %arg8[%c56_114, %c0_115], %169 {strides = array<i32>} : memref<72x512xbf16, #tpu.memory_space<vmem>>, vector<8x256xbf16>,
    %c64_116 = arith.constant 64 : index
    %c0_117 = arith.constant 0 : index
    %179 = vector.load %arg8[%c64_116, %c0_117] : memref<72x512xbf16, #tpu.memory_space<vmem>>, vector<8x256xbf16>
    tpu.vector_store %arg8[%c64_116, %c0_117], %176 {strides = array<i32>} : memref<72x512xbf16, #tpu.memory_space<vmem>>, vector<8x256xbf16>,
    %180 = vector.extract_strided_slice %114 {offsets = [0, 256], sizes = [8, 256], strides = [1, 1]} : vector<8x512xf32> to vector<8x256xf32>
    %cst_118 = arith.constant dense<0.000000e+00> : vector<8xf32>
    %181 = vector.multi_reduction <add>, %180, %cst_118 [1] : vector<8x256xf32> to vector<8xf32>
    %182 = vector.shape_cast %181 : vector<8xf32> to vector<8x1xf32>
    %183 = arith.mulf %180, %180 : vector<8x256xf32>
    %cst_119 = arith.constant dense<0.000000e+00> : vector<8xf32>
    %184 = vector.multi_reduction <add>, %183, %cst_119 [1] : vector<8x256xf32> to vector<8xf32>
    %185 = vector.shape_cast %184 : vector<8xf32> to vector<8x1xf32>
    %cst_120 = arith.constant 3.906250e-03 : f32
    %186 = vector.broadcast %cst_120 : f32 to vector<8x1xf32>
    %187 = arith.mulf %182, %186 : vector<8x1xf32>
    %cst_121 = arith.constant 3.906250e-03 : f32
    %188 = vector.broadcast %cst_121 : f32 to vector<8x1xf32>
    %189 = arith.mulf %185, %188 : vector<8x1xf32>
    %190 = arith.mulf %187, %187 : vector<8x1xf32>
    %191 = arith.subf %189, %190 : vector<8x1xf32>
    %cst_122 = arith.constant 0.000000e+00 : f32
    %192 = vector.broadcast %cst_122 : f32 to vector<8x1xf32>
    %193 = arith.maximumf %191, %192 : vector<8x1xf32>
    %cst_123 = arith.constant 9.99999974E-6 : f32
    %194 = vector.broadcast %cst_123 : f32 to vector<8x1xf32>
    %195 = arith.addf %193, %194 : vector<8x1xf32>
    %196 = math.rsqrt %195 : vector<8x1xf32>
    %197 = vector.broadcast %187 : vector<8x1xf32> to vector<8x256xf32>
    %198 = arith.subf %180, %197 : vector<8x256xf32>
    %199 = vector.broadcast %196 : vector<8x1xf32> to vector<8x256xf32>
    %200 = arith.mulf %198, %199 : vector<8x256xf32>
    %cst_124 = arith.constant 0.000000e+00 : f32
    %201 = vector.broadcast %cst_124 : f32 to vector<8x256xf32>
    %202 = arith.maximumf %200, %201 : vector<8x256xf32>
    %203 = arith.truncf %202 : vector<8x256xf32> to vector<8x256xbf16>
    %c0_125 = arith.constant 0 : index
    %c640_126 = arith.constant 640 : index
    %204 = vector.load %arg7[%c0_125, %c640_126] : memref<8x1024xbf16, #tpu.memory_space<vmem>>, vector<8x256xbf16>
    tpu.vector_store %arg7[%c0_125, %c640_126], %203 {strides = array<i32>} : memref<8x1024xbf16, #tpu.memory_space<vmem>>, vector<8x256xbf16>,
    %205 = vector.extract_strided_slice %203 {offsets = [0, 15], sizes = [8, 17], strides = [1, 1]} : vector<8x256xbf16> to vector<8x17xbf16>
    %c0_127 = arith.constant 0 : index
    %c623_128 = arith.constant 623 : index
    %206 = vector.load %arg7[%c0_127, %c623_128] : memref<8x1024xbf16, #tpu.memory_space<vmem>>, vector<8x17xbf16>
    tpu.vector_store %arg7[%c0_127, %c623_128], %205 {strides = array<i32>} : memref<8x1024xbf16, #tpu.memory_space<vmem>>, vector<8x17xbf16>,
    %207 = vector.extract_strided_slice %203 {offsets = [0, 224], sizes = [8, 17], strides = [1, 1]} : vector<8x256xbf16> to vector<8x17xbf16>
    %c0_129 = arith.constant 0 : index
    %c896_130 = arith.constant 896 : index
    %208 = vector.load %arg7[%c0_129, %c896_130] : memref<8x1024xbf16, #tpu.memory_space<vmem>>, vector<8x17xbf16>
    tpu.vector_store %arg7[%c0_129, %c896_130], %207 {strides = array<i32>} : memref<8x1024xbf16, #tpu.memory_space<vmem>>, vector<8x17xbf16>,
    %c0_131 = arith.constant 0 : index
    %c623_132 = arith.constant 623 : index
    %209 = vector.load %arg7[%c0_131, %c623_132] : memref<8x1024xbf16, #tpu.memory_space<vmem>>, vector<8x256xbf16>
    %c0_133 = arith.constant 0 : index
    %c624_134 = arith.constant 624 : index
    %210 = vector.load %arg7[%c0_133, %c624_134] : memref<8x1024xbf16, #tpu.memory_space<vmem>>, vector<8x256xbf16>
    %c0_135 = arith.constant 0 : index
    %c625_136 = arith.constant 625 : index
    %211 = vector.load %arg7[%c0_135, %c625_136] : memref<8x1024xbf16, #tpu.memory_space<vmem>>, vector<8x256xbf16>
    %212 = vector.shape_cast %18 : vector<1x256xi1> to vector<1x256xi1>
    %213 = vector.broadcast %212 : vector<1x256xi1> to vector<8x256xi1>
    %214 = arith.select %213, %211, %209 : vector<8x256xi1>, vector<8x256xbf16>
    %215 = vector.shape_cast %20 : vector<1x256xi1> to vector<1x256xi1>
    %216 = vector.broadcast %215 : vector<1x256xi1> to vector<8x256xi1>
    %217 = arith.select %216, %209, %211 : vector<8x256xi1>, vector<8x256xbf16>
    %c0_137 = arith.constant 0 : index
    %c256_138 = arith.constant 256 : index
    %218 = vector.load %arg8[%c0_137, %c256_138] : memref<72x512xbf16, #tpu.memory_space<vmem>>, vector<8x256xbf16>
    tpu.vector_store %arg8[%c0_137, %c256_138], %214 {strides = array<i32>} : memref<72x512xbf16, #tpu.memory_space<vmem>>, vector<8x256xbf16>,
    %c8_139 = arith.constant 8 : index
    %c256_140 = arith.constant 256 : index
    %219 = vector.load %arg8[%c8_139, %c256_140] : memref<72x512xbf16, #tpu.memory_space<vmem>>, vector<8x256xbf16>
    tpu.vector_store %arg8[%c8_139, %c256_140], %210 {strides = array<i32>} : memref<72x512xbf16, #tpu.memory_space<vmem>>, vector<8x256xbf16>,
    %c16_141 = arith.constant 16 : index
    %c256_142 = arith.constant 256 : index
    %220 = vector.load %arg8[%c16_141, %c256_142] : memref<72x512xbf16, #tpu.memory_space<vmem>>, vector<8x256xbf16>
    tpu.vector_store %arg8[%c16_141, %c256_142], %217 {strides = array<i32>} : memref<72x512xbf16, #tpu.memory_space<vmem>>, vector<8x256xbf16>,
    %c0_143 = arith.constant 0 : index
    %c639_144 = arith.constant 639 : index
    %221 = vector.load %arg7[%c0_143, %c639_144] : memref<8x1024xbf16, #tpu.memory_space<vmem>>, vector<8x256xbf16>
    %c0_145 = arith.constant 0 : index
    %c640_146 = arith.constant 640 : index
    %222 = vector.load %arg7[%c0_145, %c640_146] : memref<8x1024xbf16, #tpu.memory_space<vmem>>, vector<8x256xbf16>
    %c0_147 = arith.constant 0 : index
    %c641_148 = arith.constant 641 : index
    %223 = vector.load %arg7[%c0_147, %c641_148] : memref<8x1024xbf16, #tpu.memory_space<vmem>>, vector<8x256xbf16>
    %224 = vector.shape_cast %18 : vector<1x256xi1> to vector<1x256xi1>
    %225 = vector.broadcast %224 : vector<1x256xi1> to vector<8x256xi1>
    %226 = arith.select %225, %223, %221 : vector<8x256xi1>, vector<8x256xbf16>
    %227 = vector.shape_cast %20 : vector<1x256xi1> to vector<1x256xi1>
    %228 = vector.broadcast %227 : vector<1x256xi1> to vector<8x256xi1>
    %229 = arith.select %228, %221, %223 : vector<8x256xi1>, vector<8x256xbf16>
    %c24_149 = arith.constant 24 : index
    %c256_150 = arith.constant 256 : index
    %230 = vector.load %arg8[%c24_149, %c256_150] : memref<72x512xbf16, #tpu.memory_space<vmem>>, vector<8x256xbf16>
    tpu.vector_store %arg8[%c24_149, %c256_150], %226 {strides = array<i32>} : memref<72x512xbf16, #tpu.memory_space<vmem>>, vector<8x256xbf16>,
    %c32_151 = arith.constant 32 : index
    %c256_152 = arith.constant 256 : index
    %231 = vector.load %arg8[%c32_151, %c256_152] : memref<72x512xbf16, #tpu.memory_space<vmem>>, vector<8x256xbf16>
    tpu.vector_store %arg8[%c32_151, %c256_152], %222 {strides = array<i32>} : memref<72x512xbf16, #tpu.memory_space<vmem>>, vector<8x256xbf16>,
    %c40_153 = arith.constant 40 : index
    %c256_154 = arith.constant 256 : index
    %232 = vector.load %arg8[%c40_153, %c256_154] : memref<72x512xbf16, #tpu.memory_space<vmem>>, vector<8x256xbf16>
    tpu.vector_store %arg8[%c40_153, %c256_154], %229 {strides = array<i32>} : memref<72x512xbf16, #tpu.memory_space<vmem>>, vector<8x256xbf16>,
    %c0_155 = arith.constant 0 : index
    %c655_156 = arith.constant 655 : index
    %233 = vector.load %arg7[%c0_155, %c655_156] : memref<8x1024xbf16, #tpu.memory_space<vmem>>, vector<8x256xbf16>
    %c0_157 = arith.constant 0 : index
    %c656_158 = arith.constant 656 : index
    %234 = vector.load %arg7[%c0_157, %c656_158] : memref<8x1024xbf16, #tpu.memory_space<vmem>>, vector<8x256xbf16>
    %c0_159 = arith.constant 0 : index
    %c657_160 = arith.constant 657 : index
    %235 = vector.load %arg7[%c0_159, %c657_160] : memref<8x1024xbf16, #tpu.memory_space<vmem>>, vector<8x256xbf16>
    %236 = vector.shape_cast %18 : vector<1x256xi1> to vector<1x256xi1>
    %237 = vector.broadcast %236 : vector<1x256xi1> to vector<8x256xi1>
    %238 = arith.select %237, %235, %233 : vector<8x256xi1>, vector<8x256xbf16>
    %239 = vector.shape_cast %20 : vector<1x256xi1> to vector<1x256xi1>
    %240 = vector.broadcast %239 : vector<1x256xi1> to vector<8x256xi1>
    %241 = arith.select %240, %233, %235 : vector<8x256xi1>, vector<8x256xbf16>
    %c48_161 = arith.constant 48 : index
    %c256_162 = arith.constant 256 : index
    %242 = vector.load %arg8[%c48_161, %c256_162] : memref<72x512xbf16, #tpu.memory_space<vmem>>, vector<8x256xbf16>
    tpu.vector_store %arg8[%c48_161, %c256_162], %238 {strides = array<i32>} : memref<72x512xbf16, #tpu.memory_space<vmem>>, vector<8x256xbf16>,
    %c56_163 = arith.constant 56 : index
    %c256_164 = arith.constant 256 : index
    %243 = vector.load %arg8[%c56_163, %c256_164] : memref<72x512xbf16, #tpu.memory_space<vmem>>, vector<8x256xbf16>
    tpu.vector_store %arg8[%c56_163, %c256_164], %234 {strides = array<i32>} : memref<72x512xbf16, #tpu.memory_space<vmem>>, vector<8x256xbf16>,
    %c64_165 = arith.constant 64 : index
    %c256_166 = arith.constant 256 : index
    %244 = vector.load %arg8[%c64_165, %c256_166] : memref<72x512xbf16, #tpu.memory_space<vmem>>, vector<8x256xbf16>
    tpu.vector_store %arg8[%c64_165, %c256_166], %241 {strides = array<i32>} : memref<72x512xbf16, #tpu.memory_space<vmem>>, vector<8x256xbf16>,
    %c0_167 = arith.constant 0 : index
    %c0_168 = arith.constant 0 : index
    %245 = vector.load %arg4[%c0_167, %c0_168] : memref<8x72xbf16, #tpu.memory_space<vmem>>, vector<8x72xbf16>
    %c0_169 = arith.constant 0 : index
    %c0_170 = arith.constant 0 : index
    %246 = vector.load %arg8[%c0_169, %c0_170] : memref<72x512xbf16, #tpu.memory_space<vmem>>, vector<72x512xbf16>
    %cst_171 = arith.constant dense<0.000000e+00> : vector<8x512xf32>
    %247 = tpu.matmul %245, %246, %cst_171 {dimension_numbers = #tpu.dot_dimension_numbers<[1], [0], [0], [1], [0, 0, 1, 1], [], []>} : vector<8x72xbf16>, vector<72x512xbf16>, vector<8x512xf32> -> vector<8x512xf32>
    %c0_172 = arith.constant 0 : index
    %c0_173 = arith.constant 0 : index
    %248 = vector.load %arg5[%c0_172, %c0_173] : memref<8x1xf32, #tpu.memory_space<vmem>>, vector<8x1xf32>
    %249 = vector.broadcast %248 : vector<8x1xf32> to vector<8x512xf32>
    %250 = arith.addf %247, %249 : vector<8x512xf32>
    %251 = vector.extract_strided_slice %250 {offsets = [0, 0], sizes = [8, 256], strides = [1, 1]} : vector<8x512xf32> to vector<8x256xf32>
    %cst_174 = arith.constant dense<0.000000e+00> : vector<8xf32>
    %252 = vector.multi_reduction <add>, %251, %cst_174 [1] : vector<8x256xf32> to vector<8xf32>
    %253 = vector.shape_cast %252 : vector<8xf32> to vector<8x1xf32>
    %254 = arith.mulf %251, %251 : vector<8x256xf32>
    %cst_175 = arith.constant dense<0.000000e+00> : vector<8xf32>
    %255 = vector.multi_reduction <add>, %254, %cst_175 [1] : vector<8x256xf32> to vector<8xf32>
    %256 = vector.shape_cast %255 : vector<8xf32> to vector<8x1xf32>
    %cst_176 = arith.constant 3.906250e-03 : f32
    %257 = vector.broadcast %cst_176 : f32 to vector<8x1xf32>
    %258 = arith.mulf %253, %257 : vector<8x1xf32>
    %cst_177 = arith.constant 3.906250e-03 : f32
    %259 = vector.broadcast %cst_177 : f32 to vector<8x1xf32>
    %260 = arith.mulf %256, %259 : vector<8x1xf32>
    %261 = arith.mulf %258, %258 : vector<8x1xf32>
    %262 = arith.subf %260, %261 : vector<8x1xf32>
    %cst_178 = arith.constant 0.000000e+00 : f32
    %263 = vector.broadcast %cst_178 : f32 to vector<8x1xf32>
    %264 = arith.maximumf %262, %263 : vector<8x1xf32>
    %cst_179 = arith.constant 9.99999974E-6 : f32
    %265 = vector.broadcast %cst_179 : f32 to vector<8x1xf32>
    %266 = arith.addf %264, %265 : vector<8x1xf32>
    %267 = math.rsqrt %266 : vector<8x1xf32>
    %268 = vector.extract_strided_slice %250 {offsets = [0, 0], sizes = [8, 256], strides = [1, 1]} : vector<8x512xf32> to vector<8x256xf32>
    %c0_180 = arith.constant 0 : index
    %c0_181 = arith.constant 0 : index
    %c0_182 = arith.constant 0 : index
    %269 = vector.load %arg1[%c0_180, %c0_181, %c0_182] : memref<2x8x256xf32, #tpu.memory_space<vmem>>, vector<1x8x256xf32>
    %270 = vector.shape_cast %269 : vector<1x8x256xf32> to vector<8x256xf32>
    %271 = vector.broadcast %258 : vector<8x1xf32> to vector<8x256xf32>
    %272 = arith.subf %268, %271 : vector<8x256xf32>
    %273 = vector.broadcast %267 : vector<8x1xf32> to vector<8x256xf32>
    %274 = arith.mulf %272, %273 : vector<8x256xf32>
    %275 = arith.addf %270, %274 : vector<8x256xf32>
    %c0_183 = arith.constant 0 : index
    %c0_184 = arith.constant 0 : index
    %c0_185 = arith.constant 0 : index
    %276 = vector.load %arg6[%c0_183, %c0_184, %c0_185] : memref<2x8x256xf32, #tpu.memory_space<vmem>>, vector<1x8x256xf32>
    %277 = vector.shape_cast %276 : vector<1x8x256xf32> to vector<8x256xf32>
    %278 = vector.shape_cast %275 : vector<8x256xf32> to vector<1x8x256xf32>
    tpu.vector_store %arg6[%c0_183, %c0_184, %c0_185], %278 {strides = array<i32>} : memref<2x8x256xf32, #tpu.memory_space<vmem>>, vector<1x8x256xf32>,
    %279 = vector.extract_strided_slice %250 {offsets = [0, 256], sizes = [8, 256], strides = [1, 1]} : vector<8x512xf32> to vector<8x256xf32>
    %cst_186 = arith.constant dense<0.000000e+00> : vector<8xf32>
    %280 = vector.multi_reduction <add>, %279, %cst_186 [1] : vector<8x256xf32> to vector<8xf32>
    %281 = vector.shape_cast %280 : vector<8xf32> to vector<8x1xf32>
    %282 = arith.mulf %279, %279 : vector<8x256xf32>
    %cst_187 = arith.constant dense<0.000000e+00> : vector<8xf32>
    %283 = vector.multi_reduction <add>, %282, %cst_187 [1] : vector<8x256xf32> to vector<8xf32>
    %284 = vector.shape_cast %283 : vector<8xf32> to vector<8x1xf32>
    %cst_188 = arith.constant 3.906250e-03 : f32
    %285 = vector.broadcast %cst_188 : f32 to vector<8x1xf32>
    %286 = arith.mulf %281, %285 : vector<8x1xf32>
    %cst_189 = arith.constant 3.906250e-03 : f32
    %287 = vector.broadcast %cst_189 : f32 to vector<8x1xf32>
    %288 = arith.mulf %284, %287 : vector<8x1xf32>
    %289 = arith.mulf %286, %286 : vector<8x1xf32>
    %290 = arith.subf %288, %289 : vector<8x1xf32>
    %cst_190 = arith.constant 0.000000e+00 : f32
    %291 = vector.broadcast %cst_190 : f32 to vector<8x1xf32>
    %292 = arith.maximumf %290, %291 : vector<8x1xf32>
    %cst_191 = arith.constant 9.99999974E-6 : f32
    %293 = vector.broadcast %cst_191 : f32 to vector<8x1xf32>
    %294 = arith.addf %292, %293 : vector<8x1xf32>
    %295 = math.rsqrt %294 : vector<8x1xf32>
    %296 = vector.extract_strided_slice %250 {offsets = [0, 256], sizes = [8, 256], strides = [1, 1]} : vector<8x512xf32> to vector<8x256xf32>
    %c1_192 = arith.constant 1 : index
    %c0_193 = arith.constant 0 : index
    %c0_194 = arith.constant 0 : index
    %297 = vector.load %arg1[%c1_192, %c0_193, %c0_194] : memref<2x8x256xf32, #tpu.memory_space<vmem>>, vector<1x8x256xf32>
    %298 = vector.shape_cast %297 : vector<1x8x256xf32> to vector<8x256xf32>
    %299 = vector.broadcast %286 : vector<8x1xf32> to vector<8x256xf32>
    %300 = arith.subf %296, %299 : vector<8x256xf32>
    %301 = vector.broadcast %295 : vector<8x1xf32> to vector<8x256xf32>
    %302 = arith.mulf %300, %301 : vector<8x256xf32>
    %303 = arith.addf %298, %302 : vector<8x256xf32>
    %c1_195 = arith.constant 1 : index
    %c0_196 = arith.constant 0 : index
    %c0_197 = arith.constant 0 : index
    %304 = vector.load %arg6[%c1_195, %c0_196, %c0_197] : memref<2x8x256xf32, #tpu.memory_space<vmem>>, vector<1x8x256xf32>
    %305 = vector.shape_cast %304 : vector<1x8x256xf32> to vector<8x256xf32>
    %306 = vector.shape_cast %303 : vector<8x256xf32> to vector<1x8x256xf32>
    tpu.vector_store %arg6[%c1_195, %c0_196, %c0_197], %306 {strides = array<i32>} : memref<2x8x256xf32, #tpu.memory_space<vmem>>, vector<1x8x256xf32>,
    return
  }
  func.func @transform_0(%arg0: i32) -> (i32, i32, i32) {
    %c0_i32 = arith.constant 0 : i32
    %c0_i32_0 = arith.constant 0 : i32
    %c0_i32_1 = arith.constant 0 : i32
    return %arg0, %c0_i32, %c0_i32_0 : i32, i32, i32
  }
  func.func @transform_1(%arg0: i32) -> (i32, i32) {
    %c0_i32 = arith.constant 0 : i32
    %c0_i32_0 = arith.constant 0 : i32
    %c0_i32_1 = arith.constant 0 : i32
    return %c0_i32, %c0_i32_0 : i32, i32
  }
  func.func @transform_2(%arg0: i32) -> (i32, i32) {
    %c0_i32 = arith.constant 0 : i32
    %c0_i32_0 = arith.constant 0 : i32
    %c0_i32_1 = arith.constant 0 : i32
    return %c0_i32, %c0_i32_0 : i32, i32
  }
  func.func @transform_3(%arg0: i32) -> (i32, i32) {
    %c0_i32 = arith.constant 0 : i32
    %c0_i32_0 = arith.constant 0 : i32
    %c0_i32_1 = arith.constant 0 : i32
    return %c0_i32, %c0_i32_0 : i32, i32
  }
  func.func @transform_4(%arg0: i32) -> (i32, i32) {
    %c0_i32 = arith.constant 0 : i32
    %c0_i32_0 = arith.constant 0 : i32
    %c0_i32_1 = arith.constant 0 : i32
    return %c0_i32, %c0_i32_0 : i32, i32
  }
  func.func @transform_5(%arg0: i32) -> (i32, i32, i32) {
    %c0_i32 = arith.constant 0 : i32
    %c0_i32_0 = arith.constant 0 : i32
    %c0_i32_1 = arith.constant 0 : i32
    return %arg0, %c0_i32, %c0_i32_0 : i32, i32, i32
  }
}

</mosaic_0001>

<llo_original>
// kernel: residual_block.1
$region0: #{residual_block.1}
  #allocation0 [shape = 'u32[]', space=smem, size = 0x4, offset = 0x4, fixed_abs, tag = 'smem constant byte address 0x4 - core index']
  #allocation1 [shape = 'u32[144,128]{1,0:T(1,128)}', space=vmem, size = 0x12000, scoped, tag = 'internal scratch']
  #allocation2 [shape = 'bf16[8,1024]{1,0:T(8,128)(2,1)}', space=vmem, size = 0x4000, scoped, tag = 'scratch operand']
  #allocation3 [shape = 'bf16[72,512]{1,0:T(8,128)(2,1)}', space=vmem, size = 0x12000, scoped, tag = 'scratch operand']
  %s0 = inlined_call_operand.vmem [shape: f32[4,8,256], index: 0, kind: input, shape index: {}]
  %s1 = inlined_call_operand.vmem [shape: bf16[8,72], index: 1, kind: input, shape index: {}]
  %s2 = inlined_call_operand.vmem [shape: f32[8,1], index: 2, kind: input, shape index: {}]
  %s3 = inlined_call_operand.vmem [shape: bf16[8,72], index: 3, kind: input, shape index: {}]
  %s4 = inlined_call_operand.vmem [shape: f32[8,1], index: 4, kind: input, shape index: {}]
  %s5 = inlined_call_operand.vmem [shape: f32[4,8,256], index: 5, kind: output, shape index: {}]
  %s6 = sld [smem:[#allocation0]]
  $region53: #{residual_block.1} parent=0
    _
  %s8 = ssub.s32 1, %s6
  %s9 = scalar_select 0, %s8, %s6
  loop: start=0, step=1, limit=4
  $region2: #{residual_block.1} parent=0 // loop_pre_header
    _
  $region3: #{residual_block.1} parent=0 // loop_header
    %s11 = sphi 0, %s15
    %p12 = scmp.ge.s32.totalorder %s11, 4
    %s21 = sphi 0, %s23
    %s24 = sphi 0, %s21
    %s25 = sphi 0, %s24
    %s41 = sphi 0, %s25
    %s45 = sphi 0, %s45
    %s47 = sphi 0, %s45
    %s48 = sphi 0, %s47
    %s62 = sphi 0, %s48
    %s66 = sphi 0, %s66
    %s68 = sphi 0, %s66
    %s69 = sphi 0, %s68
    %s83 = sphi 0, %s69
    %s87 = sphi 0, %s87
    %s89 = sphi 0, %s87
    %s90 = sphi 0, %s89
    %s104 = sphi 0, %s90
    %s108 = sphi 0, %s108
    %s110 = sphi 0, %s108
    %s111 = sphi 0, %s110
    %s125 = sphi 0, %s111
    %s131 = sphi 0, %s133
    %s134 = sphi 0, %s131
    %s135 = sphi 0, %s134
    %s151 = sphi 0, %s135
  $region4: #{residual_block.1} parent=0 // loop_header_branch
    %14 = sbr.rel (%p12) target = $region8
  $region5: #{residual_block.1} parent=0 // loop_body
    %s16 = ssub.s32 %s11, 1
    %s17 = ssub.s32 %s11, 2
    %s18 = sadd.s32 %s11, 1
    %s19 = ssub.s32 %s11, %s18
    %p20 = scmp.eq.s32.totalorder %s19, 0
    %s22 = sadd.s32 %s21, 1
    %s23 = scalar_select %p20, %s21, %s22
    %p26 = pneg %p20
    %p27 = scmp.eq.s32.totalorder %s11, 1
    %p28 = por %p26, %p27
    %p29 = scmp.ne.s32.totalorder %s21, %s24
    %p30 = scmp.eq.s32.totalorder %s11, 0
    %p31 = por %p29, %p30
    %p32 = scmp.ne.s32.totalorder %s21, %s24
    %p33 = scmp.eq.s32.totalorder %s16, 1
    %p34 = por %p32, %p33
    %p35 = scmp.ne.s32.totalorder %s24, %s25
    %p36 = scmp.eq.s32.totalorder %s16, 0
    %p37 = por %p35, %p36
    %p38 = scmp.ne.s32.totalorder %s24, %s25
    %p39 = scmp.eq.s32.totalorder %s17, 1
    %p40 = por %p38, %p39
    %p42 = scmp.ne.s32.totalorder %s25, %s41
    %p43 = scmp.eq.s32.totalorder %s17, 0
    %p44 = por %p42, %p43
    %s46 = sadd.s32 %s45, 1
    %p49 = scmp.eq.s32.totalorder %s11, 1
    %p50 = scmp.ne.s32.totalorder %s45, %s47
    %p51 = scmp.eq.s32.totalorder %s11, 0
    %p52 = por %p50, %p51
    %p53 = scmp.ne.s32.totalorder %s45, %s47
    %p54 = scmp.eq.s32.totalorder %s16, 1
    %p55 = por %p53, %p54
    %p56 = scmp.ne.s32.totalorder %s47, %s48
    %p57 = scmp.eq.s32.totalorder %s16, 0
    %p58 = por %p56, %p57
    %p59 = scmp.ne.s32.totalorder %s47, %s48
    %p60 = scmp.eq.s32.totalorder %s17, 1
    %p61 = por %p59, %p60
    %p63 = scmp.ne.s32.totalorder %s48, %s62
    %p64 = scmp.eq.s32.totalorder %s17, 0
    %p65 = por %p63, %p64
    %s67 = sadd.s32 %s66, 1
    %p70 = scmp.eq.s32.totalorder %s11, 1
    %p71 = scmp.ne.s32.totalorder %s66, %s68
    %p72 = scmp.eq.s32.totalorder %s11, 0
    %p73 = por %p71, %p72
    %p74 = scmp.ne.s32.totalorder %s66, %s68
    %p75 = scmp.eq.s32.totalorder %s16, 1
    %p76 = por %p74, %p75
    %p77 = scmp.ne.s32.totalorder %s68, %s69
    %p78 = scmp.eq.s32.totalorder %s16, 0
    %p79 = por %p77, %p78
    %p80 = scmp.ne.s32.totalorder %s68, %s69
    %p81 = scmp.eq.s32.totalorder %s17, 1
    %p82 = por %p80, %p81
    %p84 = scmp.ne.s32.totalorder %s69, %s83
    %p85 = scmp.eq.s32.totalorder %s17, 0
    %p86 = por %p84, %p85
    %s88 = sadd.s32 %s87, 1
    %p91 = scmp.eq.s32.totalorder %s11, 1
    %p92 = scmp.ne.s32.totalorder %s87, %s89
    %p93 = scmp.eq.s32.totalorder %s11, 0
    %p94 = por %p92, %p93
    %p95 = scmp.ne.s32.totalorder %s87, %s89
    %p96 = scmp.eq.s32.totalorder %s16, 1
    %p97 = por %p95, %p96
    %p98 = scmp.ne.s32.totalorder %s89, %s90
    %p99 = scmp.eq.s32.totalorder %s16, 0
    %p100 = por %p98, %p99
    %p101 = scmp.ne.s32.totalorder %s89, %s90
    %p102 = scmp.eq.s32.totalorder %s17, 1
    %p103 = por %p101, %p102
    %p105 = scmp.ne.s32.totalorder %s90, %s104
    %p106 = scmp.eq.s32.totalorder %s17, 0
    %p107 = por %p105, %p106
    %s109 = sadd.s32 %s108, 1
    %p112 = scmp.eq.s32.totalorder %s11, 1
    %p113 = scmp.ne.s32.totalorder %s108, %s110
    %p114 = scmp.eq.s32.totalorder %s11, 0
    %p115 = por %p113, %p114
    %p116 = scmp.ne.s32.totalorder %s108, %s110
    %p117 = scmp.eq.s32.totalorder %s16, 1
    %p118 = por %p116, %p117
    %p119 = scmp.ne.s32.totalorder %s110, %s111
    %p120 = scmp.eq.s32.totalorder %s16, 0
    %p121 = por %p119, %p120
    %p122 = scmp.ne.s32.totalorder %s110, %s111
    %p123 = scmp.eq.s32.totalorder %s17, 1
    %p124 = por %p122, %p123
    %p126 = scmp.ne.s32.totalorder %s111, %s125
    %p127 = scmp.eq.s32.totalorder %s17, 0
    %p128 = por %p126, %p127
    %s129 = ssub.s32 %s11, %s18
    %p130 = scmp.eq.s32.totalorder %s129, 0
    %s132 = sadd.s32 %s131, 1
    %s133 = scalar_select %p130, %s131, %s132
    %p136 = pneg %p130
    %p137 = scmp.eq.s32.totalorder %s11, 1
    %p138 = por %p136, %p137
    %p139 = scmp.ne.s32.totalorder %s131, %s134
    %p140 = scmp.eq.s32.totalorder %s11, 0
    %p141 = por %p139, %p140
    %p142 = scmp.ne.s32.totalorder %s131, %s134
    %p143 = scmp.eq.s32.totalorder %s16, 1
    %p144 = por %p142, %p143
    %p145 = scmp.ne.s32.totalorder %s134, %s135
    %p146 = scmp.eq.s32.totalorder %s16, 0
    %p147 = por %p145, %p146
    %p148 = scmp.ne.s32.totalorder %s134, %s135
    %p149 = scmp.eq.s32.totalorder %s17, 1
    %p150 = por %p148, %p149
    %p152 = scmp.ne.s32.totalorder %s135, %s151
    %p153 = scmp.eq.s32.totalorder %s17, 0
    %p154 = por %p152, %p153
    %p155 = scmp.le.s32.totalorder 1, %s11
    %p156 = scmp.lt.s32.totalorder %s11, 3
    %p157 = pnand %p155, %p156
    %p158 = pneg %p157
    // Predicated region
    $region9: #{residual_block.1} parent=5 // pred_check
      _
    $region10: #{residual_block.1} parent=5 // pred_check_branch
      %160 = sbr.rel (%p157) target = $region12
    $region11: #{residual_block.1} parent=5 // pred_region
      %s161 = ssub.s32 %s11, 1
      // Predicated region
      $region13: #{residual_block.1} parent=11 // pred_check
        %p162 = pneg %p58
      $region14: #{residual_block.1} parent=11 // pred_check_branch
        %164 = sbr.rel (%p162) target = $region16
      $region15: #{residual_block.1} parent=11 // pred_region
        _
      $region16: #{residual_block.1} parent=11 // pred_fallthru
        _
      // Predicated region
      $region17: #{residual_block.1} parent=11 // pred_check
        %p165 = pneg %p79
      $region18: #{residual_block.1} parent=11 // pred_check_branch
        %167 = sbr.rel (%p165) target = $region20
      $region19: #{residual_block.1} parent=11 // pred_region
        _
      $region20: #{residual_block.1} parent=11 // pred_fallthru
        _
      // Predicated region
      $region21: #{residual_block.1} parent=11 // pred_check
        %p168 = pneg %p100
      $region22: #{residual_block.1} parent=11 // pred_check_branch
        %170 = sbr.rel (%p168) target = $region24
      $region23: #{residual_block.1} parent=11 // pred_region
        _
      $region24: #{residual_block.1} parent=11 // pred_fallthru
        _
      // Predicated region
      $region25: #{residual_block.1} parent=11 // pred_check
        %p171 = pneg %p121
      $region26: #{residual_block.1} parent=11 // pred_check_branch
        %173 = sbr.rel (%p171) target = $region28
      $region27: #{residual_block.1} parent=11 // pred_region
        _
      $region28: #{residual_block.1} parent=11 // pred_fallthru
        _
    $region12: #{residual_block.1} parent=5 // pred_fallthru
      _
    %p174 = scmp.lt.s32.totalorder %s11, 2
    // Predicated region
    $region29: #{residual_block.1} parent=5 // pred_check
      %p175 = pneg %p174
    $region30: #{residual_block.1} parent=5 // pred_check_branch
      %177 = sbr.rel (%p175) target = $region32
    $region31: #{residual_block.1} parent=5 // pred_region
      // Predicated region
      $region33: #{residual_block.1} parent=31 // pred_check
        %p178 = pneg %p31
      $region34: #{residual_block.1} parent=31 // pred_check_branch
        %180 = sbr.rel (%p178) target = $region36
      $region35: #{residual_block.1} parent=31 // pred_region
        %s181 = smul.u32 2, %s11
        %p182 = scmp.lt.s32.totalorder %s181, 3
        %s183 = scalar_select %p182, %s181, 3
        %s184 = smul.addr %s183, 2
        %s185 = smul.addr %s184, 8
        %s186 = scalar_lea.vmem %s0, %s185
        %s187 = smul.u32 2, %s11
      $region36: #{residual_block.1} parent=31 // pred_fallthru
        _
    $region32: #{residual_block.1} parent=5 // pred_fallthru
      _
    %p188 = scmp.le.s32.totalorder 1, %s11
    %p189 = scmp.lt.s32.totalorder %s11, 3
    %p190 = pnand %p188, %p189
    %p191 = pneg %p190
    // Predicated region
    $region37: #{residual_block.1} parent=5 // pred_check
      _
    $region38: #{residual_block.1} parent=5 // pred_check_branch
      %193 = sbr.rel (%p190) target = $region40
    $region39: #{residual_block.1} parent=5 // pred_region
      %s194 = ssub.s32 %s11, 1
      %s195 = smul.u32 2, %s16
      %p196 = scmp.lt.s32.totalorder %s195, 3
      %s197 = scalar_select %p196, %s195, 3
      %s198 = smul.addr %s197, 2
      %s199 = smul.addr %s198, 8
      %s200 = scalar_lea.vmem %s0, %s199
      %p201 = pneg %p37
      %p202 = pneg %p34
      %p203 = pneg %p58
      %p204 = pneg %p55
      %p205 = pneg %p79
      %p206 = pneg %p76
      %p207 = pneg %p100
      %p208 = pneg %p97
      %p209 = pneg %p121
      %p210 = pneg %p118
      %p211 = pneg %p147
      %p212 = pneg %p144
      %s213 = smul.u32 2, %s16
      %p214 = scmp.lt.s32.totalorder %s213, 3
      %s215 = scalar_select %p214, %s213, 3
      %s216 = smul.addr %s215, 2
      %s217 = smul.addr %s216, 8
      %s218 = scalar_lea.vmem %s5, %s217
      %s219 = smul.u32 2, %s16
      %p220 = scmp.lt.s32.totalorder %s219, 3
      %s221 = scalar_select %p220, %s219, 3
      %s222 = smul.addr %s221, 2
      %s223 = smul.addr %s222, 8
      %s224 = scalar_lea.vmem %s0, %s223
      %s225 = smul.u32 2, %s16
      %s226 = smul.u32 2, %s16
      %p227 = scmp.lt.s32.totalorder %s226, 3
      %s228 = scalar_select %p227, %s226, 3
      %s229 = smul.addr %s228, 2
      %s230 = smul.addr %s229, 8
      %s231 = scalar_lea.vmem %s5, %s230
      %s232 = smul.u32 2, %s16
      %v236 = vlaneseq
      %v237 = vand.u32 %v236, 127
      %v238 = vadd.s32 %v237, 128
      %vm239 = vcmp.lt.s32.totalorder %v237, 0
      %v240 = vsub.s32 0, %v237
      %v241 = vsel %vm239, %v240, %v237
      %v242 = vshrl.u32 %v241, 4
      %v243 = vand.u32 %v241, 15
      %v244 = vsub.s32 0, %v243
      %v245 = vsel %vm239, %v244, %v243
      %vm246 = vcmp.lt.s32.totalorder %v238, 0
      %v247 = vsub.s32 0, %v238
      %v248 = vsel %vm246, %v247, %v238
      %v249 = vshrl.u32 %v248, 4
      %v250 = vand.u32 %v248, 15
      %v251 = vsub.s32 0, %v250
      %v252 = vsel %vm246, %v251, %v250
      %vm253 = vcmp.ne.s32.totalorder %v245, 0
      %vm254 = vcmp.ne.s32.totalorder %v252, 0
      %vm255 = vcmp.lt.s32.totalorder %v245, 0
      %vm256 = vcmp.lt.s32.totalorder %v252, 0
      %vm257 = vmand %vm255, %vm253
      %vm258 = vmand %vm256, %vm254
      %v259 = vadd.s32 %v245, 16
      %v260 = vadd.s32 %v252, 16
      %v261 = vsel %vm257, %v259, %v245
      %v262 = vsel %vm258, %v260, %v252
      %vm263 = vcmp.eq.s32.totalorder %v261, 0
      %vm264 = vcmp.eq.s32.totalorder %v262, 0
      %vm265 = vcmp.eq.s32.totalorder %v261, 15
      %vm266 = vcmp.eq.s32.totalorder %v262, 15
      %v267 = vld [vmem:[%s224] sm:$0xff]
      %v268 = vld [vmem:[%s224 + $0x8] sm:$0xff]
      %v269 = vpack.c.bf16 %v267, %v267
      %v270 = vpack.c.bf16 %v268, %v268
      %v273 = vunpack.c.l.b16 %v269
      %v274 = vunpack.c.l.b16 %v270
      %v275 = vpack.c.b16 %v274, %v273
      %277 = vst [vmem:[#allocation2 + $0x4] sm:$0xff] %v275
      %v278 = vpack.c.b16 %v273, %v273
      %279 = vrot.lane.b32.xlu0 %v278, 96
      %v280 = vpop.permute.xlu0 %279
      %vm282 = vcmask 1044344
      %283 = vst.msk [vmem:[#allocation2] sm:$0xf] %vm282, %v280
      %v284 = vpack.c.b16 %v274, %v274
      %285 = vrot.lane.b32.xlu0 %v284, 32
      %v286 = vpop.permute.xlu0 %285
      %vm288 = vcmask 134144
      %289 = vst.msk [vmem:[#allocation2 + $0xc] sm:$0xf] %vm288, %v286
      %v290 = vld [vmem:[#allocation2] sm:$0xff]
      %v291 = vld [vmem:[#allocation2 + $0x8] sm:$0xf]
      %v292 = vsel %vm263, 1, 0
      %v293 = vsel %vm264, 1, 0
      %vm294 = vcmp.eq.s32.totalorder %v292, 1
      %vm295 = vcmp.eq.s32.totalorder %v293, 1
      %vm296 = vmpackc.low %vm295, %vm294
      %v297 = vsel %vm296, 65537, 0
      %298 = vrot.lane.b32.xlu0 %v297, 113
      %v299 = vpop.permute.xlu0 %298
      %v300 = vrot.slane %v299, 4
      %vm301 = vcmask 924672
      %v302 = vsel %vm301, %v300, %v299
      %vm303 = vcmp.ne.s16.totalorder %v302, 0
      %vm304 = vcmp.ne.s16.totalorder %v300, 0
      %307 = vrot.lane.b32.xlu0 %v290, 2
      %v308 = vpop.permute.xlu0 %307
      %309 = vrot.lane.b32.xlu0 %v291, 2
      %v310 = vpop.permute.xlu0 %309
      %v311 = vrot.slane %v308, 4
      %vm312 = vcmask 15360
      %v313 = vsel %vm312, %v311, %v308
      %v314 = vsel %vm312, %v311, %v310
      %v317 = vsel %vm303, %v290, %v313
      %v318 = vsel %vm304, %v291, %v314
      %v319 = vsel %vm265, 1, 0
      %v320 = vsel %vm266, 1, 0
      %vm321 = vcmp.eq.s32.totalorder %v319, 1
      %vm322 = vcmp.eq.s32.totalorder %v320, 1
      %vm323 = vmpackc.low %vm322, %vm321
      %v324 = vsel %vm323, 65537, 0
      %325 = vrot.lane.b32.xlu0 %v324, 111
      %v326 = vpop.permute.xlu0 %325
      %v327 = vrot.slane %v326, 4
      %vm328 = vcmask 908288
      %v329 = vsel %vm328, %v327, %v326
      %vm330 = vcmp.ne.s16.totalorder %v329, 0
      %vm331 = vcmp.ne.s16.totalorder %v327, 0
      %332 = vrot.lane.b32.xlu0 %v290, 126
      %v333 = vpop.permute.xlu0 %332
      %334 = vrot.lane.b32.xlu0 %v291, 126
      %v335 = vpop.permute.xlu0 %334
      %v336 = vrot.slane %v333, 4
      %v337 = vrot.slane %v335, 4
      %vm338 = vcmask 1043456
      %v339 = vsel %vm338, %v336, %v337
      %vm340 = vcmask 1031168
      %v341 = vsel %vm340, %v333, %v339
      %v344 = vsel %vm330, %v290, %v341
      %v345 = vsel %vm331, %v291, %v335
      %348 = vrot.lane.b32.xlu0 %v317, 15
      %v349 = vpop.permute.xlu0 %348
      %350 = vrot.lane.b32.xlu0 %v318, 15
      %v351 = vpop.permute.xlu0 %350
      %v352 = vrot.slane %v349, 4
      %v353 = vrot.slane %v351, 4
      %v354 = vsel %vm338, %v352, %v353
      %vm355 = vcmask 121856
      %v356 = vsel %vm355, %v349, %v354
      %358 = vst [vmem:[#allocation3] sm:$0xff] %v356
      %359 = vrot.lane.b32.xlu0 %v290, 16
      %v360 = vpop.permute.xlu0 %359
      %361 = vrot.lane.b32.xlu0 %v291, 16
      %v362 = vpop.permute.xlu0 %361
      %v363 = vrot.slane %v360, 4
      %v364 = vrot.slane %v362, 4
      %v365 = vsel %vm338, %v363, %v364
      %vm366 = vcmask 130048
      %v367 = vsel %vm366, %v360, %v365
      %369 = vst [vmem:[#allocation3 + $0x10] sm:$0xff] %v367
      %372 = vrot.lane.b32.xlu0 %v344, 17
      %v373 = vpop.permute.xlu0 %372
      %374 = vrot.lane.b32.xlu0 %v345, 17
      %v375 = vpop.permute.xlu0 %374
      %v376 = vrot.slane %v373, 4
      %v377 = vrot.slane %v375, 4
      %v378 = vsel %vm338, %v376, %v377
      %vm379 = vcmask 138240
      %v380 = vsel %vm379, %v373, %v378
      %382 = vst [vmem:[#allocation3 + $0x20] sm:$0xff] %v380
      %v383 = vld [vmem:[#allocation2] sm:$0xff]
      %v384 = vld [vmem:[#allocation2 + $0x8] sm:$0xf]
      %v385 = vld [vmem:[#allocation2 + $0x4] sm:$0xff]
      %v386 = vld [vmem:[#allocation2 + $0xc] sm:$0xf]
      %387 = vrot.lane.b32.xlu0 %v297, 1
      %v388 = vpop.permute.xlu0 %387
      %v389 = vrot.slane %v388, 4
      %vm390 = vcmask 7168
      %v391 = vsel %vm390, %v389, %v388
      %vm392 = vcmp.ne.s16.totalorder %v391, 0
      %vm393 = vcmp.ne.s16.totalorder %v389, 0
      %396 = vrot.lane.b32.xlu0 %v383, 2
      %v397 = vpop.permute.xlu0 %396
      %398 = vrot.lane.b32.xlu0 %v384, 2
      %v399 = vpop.permute.xlu0 %398
      %v400 = vrot.slane %v397, 4
      %v401 = vrot.slane %v399, 4
      %v402 = vsel %vm338, %v400, %v401
      %v403 = vsel %vm312, %v397, %v402
      %v406 = vsel %vm392, %v385, %v403
      %v407 = vsel %vm393, %v386, %v399
      %408 = vrot.lane.b32.xlu0 %v324, 127
      %v409 = vpop.permute.xlu0 %408
      %v410 = vrot.slane %v409, 4
      %vm411 = vcmask 1039360
      %v412 = vsel %vm411, %v410, %v409
      %vm413 = vcmp.ne.s16.totalorder %v412, 0
      %vm414 = vcmp.ne.s16.totalorder %v410, 0
      %417 = vrot.lane.b32.xlu0 %v385, 126
      %v418 = vpop.permute.xlu0 %417
      %419 = vrot.lane.b32.xlu0 %v386, 126
      %v420 = vpop.permute.xlu0 %419
      %v421 = vrot.slane %v418, 4
      %v422 = vsel %vm340, %v421, %v418
      %v423 = vsel %vm340, %v421, %v420
      %v426 = vsel %vm413, %v383, %v422
      %v427 = vsel %vm414, %v384, %v423
      %430 = vrot.lane.b32.xlu0 %v406, 127
      %v431 = vpop.permute.xlu0 %430
      %432 = vrot.lane.b32.xlu0 %v407, 127
      %v433 = vpop.permute.xlu0 %432
      %v434 = vrot.slane %v431, 4
      %v435 = vrot.slane %v433, 4
      %v436 = vsel %vm338, %v434, %v435
      %v437 = vsel %vm411, %v431, %v436
      %439 = vst [vmem:[#allocation3 + $0x30] sm:$0xff] %v437
      %440 = vst [vmem:[#allocation3 + $0x40] sm:$0xff] %v385
      %443 = vrot.lane.b32.xlu0 %v426, 1
      %v444 = vpop.permute.xlu0 %443
      %445 = vrot.lane.b32.xlu0 %v427, 1
      %v446 = vpop.permute.xlu0 %445
      %v447 = vrot.slane %v444, 4
      %v448 = vrot.slane %v446, 4
      %v449 = vsel %vm338, %v447, %v448
      %v450 = vsel %vm390, %v444, %v449
      %452 = vst [vmem:[#allocation3 + $0x50] sm:$0xff] %v450
      %v453 = vld [vmem:[#allocation2 + $0x4] sm:$0xff]
      %v454 = vld [vmem:[#allocation2 + $0xc] sm:$0xf]
      %455 = vrot.lane.b32.xlu0 %v297, 17
      %v456 = vpop.permute.xlu0 %455
      %v457 = vrot.slane %v456, 4
      %v458 = vsel %vm379, %v457, %v456
      %vm459 = vcmp.ne.s16.totalorder %v458, 0
      %vm460 = vcmp.ne.s16.totalorder %v457, 0
      %463 = vrot.lane.b32.xlu0 %v453, 2
      %v464 = vpop.permute.xlu0 %463
      %465 = vrot.lane.b32.xlu0 %v454, 2
      %v466 = vpop.permute.xlu0 %465
      %v467 = vrot.slane %v464, 4
      %v468 = vsel %vm312, %v467, %v464
      %v469 = vsel %vm312, %v467, %v466
      %v472 = vsel %vm459, %v453, %v468
      %v473 = vsel %vm460, %v454, %v469
      %474 = vrot.lane.b32.xlu0 %v324, 15
      %v475 = vpop.permute.xlu0 %474
      %v476 = vrot.slane %v475, 4
      %v477 = vsel %vm355, %v476, %v475
      %vm478 = vcmp.ne.s16.totalorder %v477, 0
      %vm479 = vcmp.ne.s16.totalorder %v476, 0
      %480 = vrot.lane.b32.xlu0 %v453, 126
      %v481 = vpop.permute.xlu0 %480
      %482 = vrot.lane.b32.xlu0 %v454, 126
      %v483 = vpop.permute.xlu0 %482
      %v484 = vrot.slane %v481, 4
      %v485 = vrot.slane %v483, 4
      %v486 = vsel %vm338, %v484, %v485
      %v487 = vsel %vm340, %v481, %v486
      %v490 = vsel %vm478, %v453, %v487
      %v491 = vsel %vm479, %v454, %v483
      %494 = vrot.lane.b32.xlu0 %v472, 111
      %v495 = vpop.permute.xlu0 %494
      %496 = vrot.lane.b32.xlu0 %v473, 111
      %v497 = vpop.permute.xlu0 %496
      %v498 = vrot.slane %v495, 4
      %v499 = vrot.slane %v497, 4
      %v500 = vsel %vm338, %v498, %v499
      %v501 = vsel %vm328, %v495, %v500
      %503 = vst [vmem:[#allocation3 + $0x60] sm:$0xff] %v501
      %504 = vrot.lane.b32.xlu0 %v453, 112
      %v505 = vpop.permute.xlu0 %504
      %506 = vrot.lane.b32.xlu0 %v454, 112
      %v507 = vpop.permute.xlu0 %506
      %v508 = vrot.slane %v505, 4
      %v509 = vrot.slane %v507, 4
      %v510 = vsel %vm338, %v508, %v509
      %vm511 = vcmask 916480
      %v512 = vsel %vm511, %v505, %v510
      %514 = vst [vmem:[#allocation3 + $0x70] sm:$0xff] %v512
      %517 = vrot.lane.b32.xlu0 %v490, 113
      %v518 = vpop.permute.xlu0 %517
      %519 = vrot.lane.b32.xlu0 %v491, 113
      %v520 = vpop.permute.xlu0 %519
      %v521 = vrot.slane %v518, 4
      %v522 = vrot.slane %v520, 4
      %v523 = vsel %vm338, %v521, %v522
      %v524 = vsel %vm301, %v518, %v523
      %526 = vst [vmem:[#allocation3 + $0x80] sm:$0xff] %v524
      %s527 = scalar_lea.vmem %s224, 16
      %v528 = vld [vmem:[%s527] sm:$0xff]
      %v529 = vld [vmem:[%s527 + $0x8] sm:$0xff]
      %v530 = vpack.c.bf16 %v528, %v528
      %v531 = vpack.c.bf16 %v529, %v529
      %v534 = vunpack.c.l.b16 %v530
      %v535 = vunpack.c.l.b16 %v531
      %v536 = vpack.c.b16 %v535, %v534
      %538 = vst [vmem:[#allocation2 + $0x14] sm:$0xff] %v536
      %v539 = vpack.c.b16 %v534, %v534
      %540 = vrot.lane.b32.xlu0 %v539, 96
      %v541 = vpop.permute.xlu0 %540
      %543 = vst.msk [vmem:[#allocation2 + $0x10] sm:$0xf] %vm282, %v541
      %v544 = vpack.c.b16 %v535, %v535
      %545 = vrot.lane.b32.xlu0 %v544, 32
      %v546 = vpop.permute.xlu0 %545
      %548 = vst.msk [vmem:[#allocation2 + $0x1c] sm:$0xf] %vm288, %v546
      %v549 = vld [vmem:[#allocation2 + $0x10] sm:$0xff]
      %v550 = vld [vmem:[#allocation2 + $0x18] sm:$0xf]
      %553 = vrot.lane.b32.xlu0 %v549, 2
      %v554 = vpop.permute.xlu0 %553
      %555 = vrot.lane.b32.xlu0 %v550, 2
      %v556 = vpop.permute.xlu0 %555
      %v557 = vrot.slane %v554, 4
      %v558 = vsel %vm312, %v557, %v554
      %v559 = vsel %vm312, %v557, %v556
      %v562 = vsel %vm303, %v549, %v558
      %v563 = vsel %vm304, %v550, %v559
      %564 = vrot.lane.b32.xlu0 %v549, 126
      %v565 = vpop.permute.xlu0 %564
      %566 = vrot.lane.b32.xlu0 %v550, 126
      %v567 = vpop.permute.xlu0 %566
      %v568 = vrot.slane %v565, 4
      %v569 = vrot.slane %v567, 4
      %v570 = vsel %vm338, %v568, %v569
      %v571 = vsel %vm340, %v565, %v570
      %v574 = vsel %vm330, %v549, %v571
      %v575 = vsel %vm331, %v550, %v567
      %578 = vrot.lane.b32.xlu0 %v562, 15
      %v579 = vpop.permute.xlu0 %578
      %580 = vrot.lane.b32.xlu0 %v563, 15
      %v581 = vpop.permute.xlu0 %580
      %v582 = vrot.slane %v579, 4
      %v583 = vrot.slane %v581, 4
      %v584 = vsel %vm338, %v582, %v583
      %v585 = vsel %vm355, %v579, %v584
      %587 = vst [vmem:[#allocation3 + $0x8] sm:$0xff] %v585
      %588 = vrot.lane.b32.xlu0 %v549, 16
      %v589 = vpop.permute.xlu0 %588
      %590 = vrot.lane.b32.xlu0 %v550, 16
      %v591 = vpop.permute.xlu0 %590
      %v592 = vrot.slane %v589, 4
      %v593 = vrot.slane %v591, 4
      %v594 = vsel %vm338, %v592, %v593
      %v595 = vsel %vm366, %v589, %v594
      %597 = vst [vmem:[#allocation3 + $0x18] sm:$0xff] %v595
      %600 = vrot.lane.b32.xlu0 %v574, 17
      %v601 = vpop.permute.xlu0 %600
      %602 = vrot.lane.b32.xlu0 %v575, 17
      %v603 = vpop.permute.xlu0 %602
      %v604 = vrot.slane %v601, 4
      %v605 = vrot.slane %v603, 4
      %v606 = vsel %vm338, %v604, %v605
      %v607 = vsel %vm379, %v601, %v606
      %609 = vst [vmem:[#allocation3 + $0x28] sm:$0xff] %v607
      %v610 = vld [vmem:[#allocation2 + $0x10] sm:$0xff]
      %v611 = vld [vmem:[#allocation2 + $0x18] sm:$0xf]
      %v612 = vld [vmem:[#allocation2 + $0x14] sm:$0xff]
      %v613 = vld [vmem:[#allocation2 + $0x14] sm:$0xff]
      %v614 = vld [vmem:[#allocation2 + $0x1c] sm:$0xf]
      %617 = vrot.lane.b32.xlu0 %v610, 2
      %v618 = vpop.permute.xlu0 %617
      %619 = vrot.lane.b32.xlu0 %v611, 2
      %v620 = vpop.permute.xlu0 %619
      %v621 = vrot.slane %v618, 4
      %v622 = vrot.slane %v620, 4
      %v623 = vsel %vm338, %v621, %v622
      %v624 = vsel %vm312, %v618, %v623
      %v627 = vsel %vm392, %v613, %v624
      %v628 = vsel %vm393, %v614, %v620
      %631 = vrot.lane.b32.xlu0 %v613, 126
      %v632 = vpop.permute.xlu0 %631
      %633 = vrot.lane.b32.xlu0 %v614, 126
      %v634 = vpop.permute.xlu0 %633
      %v635 = vrot.slane %v632, 4
      %v636 = vsel %vm340, %v635, %v632
      %v637 = vsel %vm340, %v635, %v634
      %v640 = vsel %vm413, %v610, %v636
      %v641 = vsel %vm414, %v611, %v637
      %644 = vrot.lane.b32.xlu0 %v627, 127
      %v645 = vpop.permute.xlu0 %644
      %646 = vrot.lane.b32.xlu0 %v628, 127
      %v647 = vpop.permute.xlu0 %646
      %v648 = vrot.slane %v645, 4
      %v649 = vrot.slane %v647, 4
      %v650 = vsel %vm338, %v648, %v649
      %v651 = vsel %vm411, %v645, %v650
      %653 = vst [vmem:[#allocation3 + $0x38] sm:$0xff] %v651
      %654 = vst [vmem:[#allocation3 + $0x48] sm:$0xff] %v612
      %657 = vrot.lane.b32.xlu0 %v640, 1
      %v658 = vpop.permute.xlu0 %657
      %659 = vrot.lane.b32.xlu0 %v641, 1
      %v660 = vpop.permute.xlu0 %659
      %v661 = vrot.slane %v658, 4
      %v662 = vrot.slane %v660, 4
      %v663 = vsel %vm338, %v661, %v662
      %v664 = vsel %vm390, %v658, %v663
      %666 = vst [vmem:[#allocation3 + $0x58] sm:$0xff] %v664
      %v667 = vld [vmem:[#allocation2 + $0x14] sm:$0xff]
      %v668 = vld [vmem:[#allocation2 + $0x1c] sm:$0xf]
      %671 = vrot.lane.b32.xlu0 %v667, 2
      %v672 = vpop.permute.xlu0 %671
      %673 = vrot.lane.b32.xlu0 %v668, 2
      %v674 = vpop.permute.xlu0 %673
      %v675 = vrot.slane %v672, 4
      %v676 = vsel %vm312, %v675, %v672
      %v677 = vsel %vm312, %v675, %v674
      %v680 = vsel %vm459, %v667, %v676
      %v681 = vsel %vm460, %v668, %v677
      %682 = vrot.lane.b32.xlu0 %v667, 126
      %v683 = vpop.permute.xlu0 %682
      %684 = vrot.lane.b32.xlu0 %v668, 126
      %v685 = vpop.permute.xlu0 %684
      %v686 = vrot.slane %v683, 4
      %v687 = vrot.slane %v685, 4
      %v688 = vsel %vm338, %v686, %v687
      %v689 = vsel %vm340, %v683, %v688
      %v692 = vsel %vm478, %v667, %v689
      %v693 = vsel %vm479, %v668, %v685
      %696 = vrot.lane.b32.xlu0 %v680, 111
      %v697 = vpop.permute.xlu0 %696
      %698 = vrot.lane.b32.xlu0 %v681, 111
      %v699 = vpop.permute.xlu0 %698
      %v700 = vrot.slane %v697, 4
      %v701 = vrot.slane %v699, 4
      %v702 = vsel %vm338, %v700, %v701
      %v703 = vsel %vm328, %v697, %v702
      %705 = vst [vmem:[#allocation3 + $0x68] sm:$0xff] %v703
      %706 = vrot.lane.b32.xlu0 %v667, 112
      %v707 = vpop.permute.xlu0 %706
      %708 = vrot.lane.b32.xlu0 %v668, 112
      %v709 = vpop.permute.xlu0 %708
      %v710 = vrot.slane %v707, 4
      %v711 = vrot.slane %v709, 4
      %v712 = vsel %vm338, %v710, %v711
      %v713 = vsel %vm511, %v707, %v712
      %715 = vst [vmem:[#allocation3 + $0x78] sm:$0xff] %v713
      %718 = vrot.lane.b32.xlu0 %v692, 113
      %v719 = vpop.permute.xlu0 %718
      %720 = vrot.lane.b32.xlu0 %v693, 113
      %v721 = vpop.permute.xlu0 %720
      %v722 = vrot.slane %v719, 4
      %v723 = vrot.slane %v721, 4
      %v724 = vsel %vm338, %v722, %v723
      %v725 = vsel %vm301, %v719, %v724
      %727 = vst [vmem:[#allocation3 + $0x88] sm:$0xff] %v725
      %v728 = vld [vmem:[%s1] sm:$0xf]
      %v729 = vld [vmem:[#allocation3] sm:$0xff]
      %v730 = vld [vmem:[#allocation3 + $0x8] sm:$0xff]
      %v731 = vld [vmem:[#allocation3 + $0x10] sm:$0xff]
      %v732 = vld [vmem:[#allocation3 + $0x18] sm:$0xff]
      %v733 = vld [vmem:[#allocation3 + $0x20] sm:$0xff]
      %v734 = vld [vmem:[#allocation3 + $0x28] sm:$0xff]
      %v735 = vld [vmem:[#allocation3 + $0x30] sm:$0xff]
      %v736 = vld [vmem:[#allocation3 + $0x38] sm:$0xff]
      %v737 = vld [vmem:[#allocation3 + $0x40] sm:$0xff]
      %v738 = vld [vmem:[#allocation3 + $0x48] sm:$0xff]
      %v739 = vld [vmem:[#allocation3 + $0x50] sm:$0xff]
      %v740 = vld [vmem:[#allocation3 + $0x58] sm:$0xff]
      %v741 = vld [vmem:[#allocation3 + $0x60] sm:$0xff]
      %v742 = vld [vmem:[#allocation3 + $0x68] sm:$0xff]
      %v743 = vld [vmem:[#allocation3 + $0x70] sm:$0xff]
      %v744 = vld [vmem:[#allocation3 + $0x78] sm:$0xff]
      %v745 = vld [vmem:[#allocation3 + $0x80] sm:$0xff]
      %v746 = vld [vmem:[#allocation3 + $0x88] sm:$0xff]
      %v747 = vld [vmem:[%s2] sm:$0xff]
      %749 = vset.pattern.permute.xlu0 0
      %750 = vperm.xlu0 %749, %v747
      %v751 = vpop.permute.xlu0 %750
      %v771 = vunpack.c.l.b16 %v729
      %v772 = vunpack.c.h.b16 %v729
      %v773 = vunpack.c.l.b16 %v730
      %v774 = vunpack.c.h.b16 %v730
      %v775 = vunpack.c.l.b16 %v731
      %v776 = vunpack.c.h.b16 %v731
      %v777 = vunpack.c.l.b16 %v732
      %v778 = vunpack.c.h.b16 %v732
      %v779 = vunpack.c.l.b16 %v733
      %v780 = vunpack.c.h.b16 %v733
      %v781 = vunpack.c.l.b16 %v734
      %v782 = vunpack.c.h.b16 %v734
      %v783 = vunpack.c.l.b16 %v735
      %v784 = vunpack.c.h.b16 %v735
      %v785 = vunpack.c.l.b16 %v736
      %v786 = vunpack.c.h.b16 %v736
      %v787 = vunpack.c.l.b16 %v737
      %v788 = vunpack.c.h.b16 %v737
      %v789 = vunpack.c.l.b16 %v738
      %v790 = vunpack.c.h.b16 %v738
      %v791 = vunpack.c.l.b16 %v739
      %v792 = vunpack.c.h.b16 %v739
      %v793 = vunpack.c.l.b16 %v740
      %v794 = vunpack.c.h.b16 %v740
      %v795 = vunpack.c.l.b16 %v741
      %v796 = vunpack.c.h.b16 %v741
      %v797 = vunpack.c.l.b16 %v742
      %v798 = vunpack.c.h.b16 %v742
      %v799 = vunpack.c.l.b16 %v743
      %v800 = vunpack.c.h.b16 %v743
      %v801 = vunpack.c.l.b16 %v744
      %v802 = vunpack.c.h.b16 %v744
      %v803 = vunpack.c.l.b16 %v745
      %v804 = vunpack.c.h.b16 %v745
      %v805 = vunpack.c.l.b16 %v746
      %v806 = vunpack.c.h.b16 %v746
      %v807 = vpack.c.b16 %v775, %v771
      %v808 = vpack.c.b16 %v776, %v772
      %v809 = vpack.c.b16 %v777, %v773
      %v810 = vpack.c.b16 %v778, %v774
      %v811 = vpack.c.b16 %v783, %v779
      %v812 = vpack.c.b16 %v784, %v780
      %v813 = vpack.c.b16 %v785, %v781
      %v814 = vpack.c.b16 %v786, %v782
      %v815 = vpack.c.b16 %v791, %v787
      %v816 = vpack.c.b16 %v792, %v788
      %v817 = vpack.c.b16 %v793, %v789
      %v818 = vpack.c.b16 %v794, %v790
      %v819 = vpack.c.b16 %v799, %v795
      %v820 = vpack.c.b16 %v800, %v796
      %v821 = vpack.c.b16 %v801, %v797
      %v822 = vpack.c.b16 %v802, %v798
      %v823 = vpack.c.b16 %v803, %v803
      %v824 = vpack.c.b16 %v804, %v804
      %v825 = vpack.c.b16 %v805, %v805
      %v826 = vpack.c.b16 %v806, %v806
      %vm843 = vcmask 588800
      %v845 = vsel %vm843, %v728, 0
      %vm847 = vcmask 1043456
      %v849 = vsel %vm847, %v823, 0
      %v852 = vsel %vm847, %v824, 0
      %v855 = vsel %vm847, %v825, 0
      %v858 = vsel %vm847, %v826, 0
      %860 = vmatprep.subr.bf16.mxu0 %v808
      %861 = vmatpush1.bf16.msra.mxu0 %v807
      %862 = vmatprep.subr.bf16.mxu0 %v812
      %863 = vmatpush1.bf16.msra.mxu0 %v811
      %864 = vmatprep.subr.bf16.mxu0 %v816
      %865 = vmatpush1.bf16.msra.mxu0 %v815
      %866 = vmatprep.subr.bf16.mxu0 %v820
      %867 = vmatpush1.bf16.msra.mxu0 %v819
      %868 = vmatprep.subr.bf16.mxu0 %v852
      %869 = vmatpush1.bf16.msra.mxu0 %v849
      %870 = vmatprep.subr.bf16.mxu0 0
      %871 = vmatpush1.bf16.msra.mxu0 0
      %872 = vmatprep.subr.bf16.mxu0 0
      %873 = vmatpush1.bf16.msra.mxu0 0
      %874 = vmatprep.subr.bf16.mxu0 0
      %875 = vmatpush1.bf16.msra.mxu0 0
      %876 = vmatprep.subr.bf16.mxu0 0
      %877 = vmatpush1.bf16.msra.mxu0 0
      %878 = vmatprep.subr.bf16.mxu0 0
      %879 = vmatpush1.bf16.msra.mxu0 0
      %880 = vmatprep.subr.bf16.mxu0 0
      %881 = vmatpush1.bf16.msra.mxu0 0
      %882 = vmatprep.subr.bf16.mxu0 0
      %883 = vmatpush1.bf16.msra.mxu0 0
      %884 = vmatprep.subr.bf16.mxu0 0
      %885 = vmatpush1.bf16.msra.mxu0 0
      %886 = vmatprep.subr.bf16.mxu0 0
      %887 = vmatpush1.bf16.msra.mxu0 0
      %888 = vmatprep.subr.bf16.mxu0 0
      %889 = vmatpush1.bf16.msra.mxu0 0
      %890 = vmatprep.subr.bf16.mxu0 0
      %891 = vmatpush1.bf16.msra.mxu0 0
      %892 = vmatprep.mubr.bf16.mxu0 0
      %893 = vmatmul.mubr.bf16.gmra.mrb[0].mxu0 %v845
      %v894 = vpop.f32.mrb[0].mxu0
      %v895 = vadd.f32 %v751, %v894
      %v896 = vpop.f32.mrb[0].mxu0
      %v897 = vadd.f32 %v751, %v896
      %v898 = vpop.f32.mrb[0].mxu0
      %v899 = vpop.f32.mrb[0].mxu0
      %900 = vdwg.mxu0
      %901 = vmatprep.subr.bf16.mxu0 %v810
      %902 = vmatpush1.bf16.msra.mxu0 %v809
      %903 = vmatprep.subr.bf16.mxu0 %v814
      %904 = vmatpush1.bf16.msra.mxu0 %v813
      %905 = vmatprep.subr.bf16.mxu0 %v818
      %906 = vmatpush1.bf16.msra.mxu0 %v817
      %907 = vmatprep.subr.bf16.mxu0 %v822
      %908 = vmatpush1.bf16.msra.mxu0 %v821
      %909 = vmatprep.subr.bf16.mxu0 %v858
      %910 = vmatpush1.bf16.msra.mxu0 %v855
      %911 = vmatprep.subr.bf16.mxu0 0
      %912 = vmatpush1.bf16.msra.mxu0 0
      %913 = vmatprep.subr.bf16.mxu0 0
      %914 = vmatpush1.bf16.msra.mxu0 0
      %915 = vmatprep.subr.bf16.mxu0 0
      %916 = vmatpush1.bf16.msra.mxu0 0
      %917 = vmatprep.subr.bf16.mxu0 0
      %918 = vmatpush1.bf16.msra.mxu0 0
      %919 = vmatprep.subr.bf16.mxu0 0
      %920 = vmatpush1.bf16.msra.mxu0 0
      %921 = vmatprep.subr.bf16.mxu0 0
      %922 = vmatpush1.bf16.msra.mxu0 0
      %923 = vmatprep.subr.bf16.mxu0 0
      %924 = vmatpush1.bf16.msra.mxu0 0
      %925 = vmatprep.subr.bf16.mxu0 0
      %926 = vmatpush1.bf16.msra.mxu0 0
      %927 = vmatprep.subr.bf16.mxu0 0
      %928 = vmatpush1.bf16.msra.mxu0 0
      %929 = vmatprep.subr.bf16.mxu0 0
      %930 = vmatpush1.bf16.msra.mxu0 0
      %931 = vmatprep.subr.bf16.mxu0 0
      %932 = vmatpush1.bf16.msra.mxu0 0
      %933 = vmatprep.mubr.bf16.mxu0 0
      %934 = vmatmul.mubr.bf16.gmra.mrb[0].mxu0 %v845
      %v935 = vpop.f32.mrb[0].mxu0
      %v936 = vadd.f32 %v751, %v935
      %v937 = vpop.f32.mrb[0].mxu0
      %v938 = vadd.f32 %v751, %v937
      %v939 = vpop.f32.mrb[0].mxu0
      %v940 = vpop.f32.mrb[0].mxu0
      %941 = vdwg.mxu0
      %v942 = vadd.f32 %v895, %v897
      %943 = vadd.xlane.f32.xlu0 %v942
      %v944 = vpop.xlane.xlu0 %943
      %v945 = vmul.f32 %v895, %v895
      %v946 = vmul.f32 %v897, %v897
      %v947 = vadd.f32 %v945, %v946
      %948 = vadd.xlane.f32.xlu0 %v947
      %v949 = vpop.xlane.xlu0 %948
      %v950 = vmul.f32 %v944, 0.00390625
      %v951 = vmul.f32 %v949, 0.00390625
      %v952 = vmul.f32 %v950, %v950
      %v953 = vsub.f32 %v951, %v952
      %v954 = vmax.f32 %v953, 0.0
      %v955 = vadd.f32 %v954, 1e-05
      %v956 = vrsqrt.pop %v955
      %v957 = vsub.f32 %v895, %v950
      %v958 = vsub.f32 %v897, %v950
      %v959 = vmul.f32 %v957, %v956
      %v960 = vmul.f32 %v958, %v956
      %v961 = vmax.f32 %v959, 0.0
      %v962 = vmax.f32 %v960, 0.0
      %v963 = vpack.c.bf16 %v961, %v961
      %v964 = vpack.c.bf16 %v962, %v962
      %v967 = vunpack.c.l.b16 %v963
      %v968 = vunpack.c.l.b16 %v964
      %v969 = vpack.c.b16 %v968, %v967
      %971 = vst [vmem:[#allocation2 + $0x4] sm:$0xff] %v969
      %v972 = vpack.c.b16 %v967, %v967
      %973 = vrot.lane.b32.xlu0 %v972, 96
      %v974 = vpop.permute.xlu0 %973
      %976 = vst.msk [vmem:[#allocation2] sm:$0xf] %vm282, %v974
      %v977 = vpack.c.b16 %v968, %v968
      %978 = vrot.lane.b32.xlu0 %v977, 32
      %v979 = vpop.permute.xlu0 %978
      %981 = vst.msk [vmem:[#allocation2 + $0xc] sm:$0xf] %vm288, %v979
      %v982 = vld [vmem:[#allocation2] sm:$0xff]
      %v983 = vld [vmem:[#allocation2 + $0x8] sm:$0xf]
      %986 = vrot.lane.b32.xlu0 %v982, 2
      %v987 = vpop.permute.xlu0 %986
      %988 = vrot.lane.b32.xlu0 %v983, 2
      %v989 = vpop.permute.xlu0 %988
      %v990 = vrot.slane %v987, 4
      %v991 = vsel %vm312, %v990, %v987
      %v992 = vsel %vm312, %v990, %v989
      %v995 = vsel %vm303, %v982, %v991
      %v996 = vsel %vm304, %v983, %v992
      %997 = vrot.lane.b32.xlu0 %v982, 126
      %v998 = vpop.permute.xlu0 %997
      %999 = vrot.lane.b32.xlu0 %v983, 126
      %v1000 = vpop.permute.xlu0 %999
      %v1001 = vrot.slane %v998, 4
      %v1002 = vrot.slane %v1000, 4
      %v1003 = vsel %vm338, %v1001, %v1002
      %v1004 = vsel %vm340, %v998, %v1003
      %v1007 = vsel %vm330, %v982, %v1004
      %v1008 = vsel %vm331, %v983, %v1000
      %1011 = vrot.lane.b32.xlu0 %v995, 15
      %v1012 = vpop.permute.xlu0 %1011
      %1013 = vrot.lane.b32.xlu0 %v996, 15
      %v1014 = vpop.permute.xlu0 %1013
      %v1015 = vrot.slane %v1012, 4
      %v1016 = vrot.slane %v1014, 4
      %v1017 = vsel %vm338, %v1015, %v1016
      %v1018 = vsel %vm355, %v1012, %v1017
      %1020 = vst [vmem:[#allocation3] sm:$0xff] %v1018
      %1021 = vrot.lane.b32.xlu0 %v982, 16
      %v1022 = vpop.permute.xlu0 %1021
      %1023 = vrot.lane.b32.xlu0 %v983, 16
      %v1024 = vpop.permute.xlu0 %1023
      %v1025 = vrot.slane %v1022, 4
      %v1026 = vrot.slane %v1024, 4
      %v1027 = vsel %vm338, %v1025, %v1026
      %v1028 = vsel %vm366, %v1022, %v1027
      %1030 = vst [vmem:[#allocation3 + $0x10] sm:$0xff] %v1028
      %1033 = vrot.lane.b32.xlu0 %v1007, 17
      %v1034 = vpop.permute.xlu0 %1033
      %1035 = vrot.lane.b32.xlu0 %v1008, 17
      %v1036 = vpop.permute.xlu0 %1035
      %v1037 = vrot.slane %v1034, 4
      %v1038 = vrot.slane %v1036, 4
      %v1039 = vsel %vm338, %v1037, %v1038
      %v1040 = vsel %vm379, %v1034, %v1039
      %1042 = vst [vmem:[#allocation3 + $0x20] sm:$0xff] %v1040
      %v1043 = vld [vmem:[#allocation2] sm:$0xff]
      %v1044 = vld [vmem:[#allocation2 + $0x8] sm:$0xf]
      %v1045 = vld [vmem:[#allocation2 + $0x4] sm:$0xff]
      %v1046 = vld [vmem:[#allocation2 + $0xc] sm:$0xf]
      %1049 = vrot.lane.b32.xlu0 %v1043, 2
      %v1050 = vpop.permute.xlu0 %1049
      %1051 = vrot.lane.b32.xlu0 %v1044, 2
      %v1052 = vpop.permute.xlu0 %1051
      %v1053 = vrot.slane %v1050, 4
      %v1054 = vrot.slane %v1052, 4
      %v1055 = vsel %vm338, %v1053, %v1054
      %v1056 = vsel %vm312, %v1050, %v1055
      %v1059 = vsel %vm392, %v1045, %v1056
      %v1060 = vsel %vm393, %v1046, %v1052
      %1063 = vrot.lane.b32.xlu0 %v1045, 126
      %v1064 = vpop.permute.xlu0 %1063
      %1065 = vrot.lane.b32.xlu0 %v1046, 126
      %v1066 = vpop.permute.xlu0 %1065
      %v1067 = vrot.slane %v1064, 4
      %v1068 = vsel %vm340, %v1067, %v1064
      %v1069 = vsel %vm340, %v1067, %v1066
      %v1072 = vsel %vm413, %v1043, %v1068
      %v1073 = vsel %vm414, %v1044, %v1069
      %1076 = vrot.lane.b32.xlu0 %v1059, 127
      %v1077 = vpop.permute.xlu0 %1076
      %1078 = vrot.lane.b32.xlu0 %v1060, 127
      %v1079 = vpop.permute.xlu0 %1078
      %v1080 = vrot.slane %v1077, 4
      %v1081 = vrot.slane %v1079, 4
      %v1082 = vsel %vm338, %v1080, %v1081
      %v1083 = vsel %vm411, %v1077, %v1082
      %1085 = vst [vmem:[#allocation3 + $0x30] sm:$0xff] %v1083
      %1086 = vst [vmem:[#allocation3 + $0x40] sm:$0xff] %v1045
      %1089 = vrot.lane.b32.xlu0 %v1072, 1
      %v1090 = vpop.permute.xlu0 %1089
      %1091 = vrot.lane.b32.xlu0 %v1073, 1
      %v1092 = vpop.permute.xlu0 %1091
      %v1093 = vrot.slane %v1090, 4
      %v1094 = vrot.slane %v1092, 4
      %v1095 = vsel %vm338, %v1093, %v1094
      %v1096 = vsel %vm390, %v1090, %v1095
      %1098 = vst [vmem:[#allocation3 + $0x50] sm:$0xff] %v1096
      %v1099 = vld [vmem:[#allocation2 + $0x4] sm:$0xff]
      %v1100 = vld [vmem:[#allocation2 + $0xc] sm:$0xf]
      %1103 = vrot.lane.b32.xlu0 %v1099, 2
      %v1104 = vpop.permute.xlu0 %1103
      %1105 = vrot.lane.b32.xlu0 %v1100, 2
      %v1106 = vpop.permute.xlu0 %1105
      %v1107 = vrot.slane %v1104, 4
      %v1108 = vsel %vm312, %v1107, %v1104
      %v1109 = vsel %vm312, %v1107, %v1106
      %v1112 = vsel %vm459, %v1099, %v1108
      %v1113 = vsel %vm460, %v1100, %v1109
      %1114 = vrot.lane.b32.xlu0 %v1099, 126
      %v1115 = vpop.permute.xlu0 %1114
      %1116 = vrot.lane.b32.xlu0 %v1100, 126
      %v1117 = vpop.permute.xlu0 %1116
      %v1118 = vrot.slane %v1115, 4
      %v1119 = vrot.slane %v1117, 4
      %v1120 = vsel %vm338, %v1118, %v1119
      %v1121 = vsel %vm340, %v1115, %v1120
      %v1124 = vsel %vm478, %v1099, %v1121
      %v1125 = vsel %vm479, %v1100, %v1117
      %1128 = vrot.lane.b32.xlu0 %v1112, 111
      %v1129 = vpop.permute.xlu0 %1128
      %1130 = vrot.lane.b32.xlu0 %v1113, 111
      %v1131 = vpop.permute.xlu0 %1130
      %v1132 = vrot.slane %v1129, 4
      %v1133 = vrot.slane %v1131, 4
      %v1134 = vsel %vm338, %v1132, %v1133
      %v1135 = vsel %vm328, %v1129, %v1134
      %1137 = vst [vmem:[#allocation3 + $0x60] sm:$0xff] %v1135
      %1138 = vrot.lane.b32.xlu0 %v1099, 112
      %v1139 = vpop.permute.xlu0 %1138
      %1140 = vrot.lane.b32.xlu0 %v1100, 112
      %v1141 = vpop.permute.xlu0 %1140
      %v1142 = vrot.slane %v1139, 4
      %v1143 = vrot.slane %v1141, 4
      %v1144 = vsel %vm338, %v1142, %v1143
      %v1145 = vsel %vm511, %v1139, %v1144
      %1147 = vst [vmem:[#allocation3 + $0x70] sm:$0xff] %v1145
      %1150 = vrot.lane.b32.xlu0 %v1124, 113
      %v1151 = vpop.permute.xlu0 %1150
      %1152 = vrot.lane.b32.xlu0 %v1125, 113
      %v1153 = vpop.permute.xlu0 %1152
      %v1154 = vrot.slane %v1151, 4
      %v1155 = vrot.slane %v1153, 4
      %v1156 = vsel %vm338, %v1154, %v1155
      %v1157 = vsel %vm301, %v1151, %v1156
      %1159 = vst [vmem:[#allocation3 + $0x80] sm:$0xff] %v1157
      %v1160 = vadd.f32 %v936, %v938
      %1161 = vadd.xlane.f32.xlu0 %v1160
      %v1162 = vpop.xlane.xlu0 %1161
      %v1163 = vmul.f32 %v936, %v936
      %v1164 = vmul.f32 %v938, %v938
      %v1165 = vadd.f32 %v1163, %v1164
      %1166 = vadd.xlane.f32.xlu0 %v1165
      %v1167 = vpop.xlane.xlu0 %1166
      %v1168 = vmul.f32 %v1162, 0.00390625
      %v1169 = vmul.f32 %v1167, 0.00390625
      %v1170 = vmul.f32 %v1168, %v1168
      %v1171 = vsub.f32 %v1169, %v1170
      %v1172 = vmax.f32 %v1171, 0.0
      %v1173 = vadd.f32 %v1172, 1e-05
      %v1174 = vrsqrt.pop %v1173
      %v1175 = vsub.f32 %v936, %v1168
      %v1176 = vsub.f32 %v938, %v1168
      %v1177 = vmul.f32 %v1175, %v1174
      %v1178 = vmul.f32 %v1176, %v1174
      %v1179 = vmax.f32 %v1177, 0.0
      %v1180 = vmax.f32 %v1178, 0.0
      %v1181 = vpack.c.bf16 %v1179, %v1179
      %v1182 = vpack.c.bf16 %v1180, %v1180
      %v1185 = vunpack.c.l.b16 %v1181
      %v1186 = vunpack.c.l.b16 %v1182
      %v1187 = vpack.c.b16 %v1186, %v1185
      %1189 = vst [vmem:[#allocation2 + $0x14] sm:$0xff] %v1187
      %v1190 = vpack.c.b16 %v1185, %v1185
      %1191 = vrot.lane.b32.xlu0 %v1190, 96
      %v1192 = vpop.permute.xlu0 %1191
      %1194 = vst.msk [vmem:[#allocation2 + $0x10] sm:$0xf] %vm282, %v1192
      %v1195 = vpack.c.b16 %v1186, %v1186
      %1196 = vrot.lane.b32.xlu0 %v1195, 32
      %v1197 = vpop.permute.xlu0 %1196
      %1199 = vst.msk [vmem:[#allocation2 + $0x1c] sm:$0xf] %vm288, %v1197
      %v1200 = vld [vmem:[#allocation2 + $0x10] sm:$0xff]
      %v1201 = vld [vmem:[#allocation2 + $0x18] sm:$0xf]
      %1204 = vrot.lane.b32.xlu0 %v1200, 2
      %v1205 = vpop.permute.xlu0 %1204
      %1206 = vrot.lane.b32.xlu0 %v1201, 2
      %v1207 = vpop.permute.xlu0 %1206
      %v1208 = vrot.slane %v1205, 4
      %v1209 = vsel %vm312, %v1208, %v1205
      %v1210 = vsel %vm312, %v1208, %v1207
      %v1213 = vsel %vm303, %v1200, %v1209
      %v1214 = vsel %vm304, %v1201, %v1210
      %1215 = vrot.lane.b32.xlu0 %v1200, 126
      %v1216 = vpop.permute.xlu0 %1215
      %1217 = vrot.lane.b32.xlu0 %v1201, 126
      %v1218 = vpop.permute.xlu0 %1217
      %v1219 = vrot.slane %v1216, 4
      %v1220 = vrot.slane %v1218, 4
      %v1221 = vsel %vm338, %v1219, %v1220
      %v1222 = vsel %vm340, %v1216, %v1221
      %v1225 = vsel %vm330, %v1200, %v1222
      %v1226 = vsel %vm331, %v1201, %v1218
      %1229 = vrot.lane.b32.xlu0 %v1213, 15
      %v1230 = vpop.permute.xlu0 %1229
      %1231 = vrot.lane.b32.xlu0 %v1214, 15
      %v1232 = vpop.permute.xlu0 %1231
      %v1233 = vrot.slane %v1230, 4
      %v1234 = vrot.slane %v1232, 4
      %v1235 = vsel %vm338, %v1233, %v1234
      %v1236 = vsel %vm355, %v1230, %v1235
      %1238 = vst [vmem:[#allocation3 + $0x8] sm:$0xff] %v1236
      %1239 = vrot.lane.b32.xlu0 %v1200, 16
      %v1240 = vpop.permute.xlu0 %1239
      %1241 = vrot.lane.b32.xlu0 %v1201, 16
      %v1242 = vpop.permute.xlu0 %1241
      %v1243 = vrot.slane %v1240, 4
      %v1244 = vrot.slane %v1242, 4
      %v1245 = vsel %vm338, %v1243, %v1244
      %v1246 = vsel %vm366, %v1240, %v1245
      %1248 = vst [vmem:[#allocation3 + $0x18] sm:$0xff] %v1246
      %1251 = vrot.lane.b32.xlu0 %v1225, 17
      %v1252 = vpop.permute.xlu0 %1251
      %1253 = vrot.lane.b32.xlu0 %v1226, 17
      %v1254 = vpop.permute.xlu0 %1253
      %v1255 = vrot.slane %v1252, 4
      %v1256 = vrot.slane %v1254, 4
      %v1257 = vsel %vm338, %v1255, %v1256
      %v1258 = vsel %vm379, %v1252, %v1257
      %1260 = vst [vmem:[#allocation3 + $0x28] sm:$0xff] %v1258
      %v1261 = vld [vmem:[#allocation2 + $0x10] sm:$0xff]
      %v1262 = vld [vmem:[#allocation2 + $0x18] sm:$0xf]
      %v1263 = vld [vmem:[#allocation2 + $0x14] sm:$0xff]
      %v1264 = vld [vmem:[#allocation2 + $0x14] sm:$0xff]
      %v1265 = vld [vmem:[#allocation2 + $0x1c] sm:$0xf]
      %1268 = vrot.lane.b32.xlu0 %v1261, 2
      %v1269 = vpop.permute.xlu0 %1268
      %1270 = vrot.lane.b32.xlu0 %v1262, 2
      %v1271 = vpop.permute.xlu0 %1270
      %v1272 = vrot.slane %v1269, 4
      %v1273 = vrot.slane %v1271, 4
      %v1274 = vsel %vm338, %v1272, %v1273
      %v1275 = vsel %vm312, %v1269, %v1274
      %v1278 = vsel %vm392, %v1264, %v1275
      %v1279 = vsel %vm393, %v1265, %v1271
      %1282 = vrot.lane.b32.xlu0 %v1264, 126
      %v1283 = vpop.permute.xlu0 %1282
      %1284 = vrot.lane.b32.xlu0 %v1265, 126
      %v1285 = vpop.permute.xlu0 %1284
      %v1286 = vrot.slane %v1283, 4
      %v1287 = vsel %vm340, %v1286, %v1283
      %v1288 = vsel %vm340, %v1286, %v1285
      %v1291 = vsel %vm413, %v1261, %v1287
      %v1292 = vsel %vm414, %v1262, %v1288
      %1295 = vrot.lane.b32.xlu0 %v1278, 127
      %v1296 = vpop.permute.xlu0 %1295
      %1297 = vrot.lane.b32.xlu0 %v1279, 127
      %v1298 = vpop.permute.xlu0 %1297
      %v1299 = vrot.slane %v1296, 4
      %v1300 = vrot.slane %v1298, 4
      %v1301 = vsel %vm338, %v1299, %v1300
      %v1302 = vsel %vm411, %v1296, %v1301
      %1304 = vst [vmem:[#allocation3 + $0x38] sm:$0xff] %v1302
      %1305 = vst [vmem:[#allocation3 + $0x48] sm:$0xff] %v1263
      %1308 = vrot.lane.b32.xlu0 %v1291, 1
      %v1309 = vpop.permute.xlu0 %1308
      %1310 = vrot.lane.b32.xlu0 %v1292, 1
      %v1311 = vpop.permute.xlu0 %1310
      %v1312 = vrot.slane %v1309, 4
      %v1313 = vrot.slane %v1311, 4
      %v1314 = vsel %vm338, %v1312, %v1313
      %v1315 = vsel %vm390, %v1309, %v1314
      %1317 = vst [vmem:[#allocation3 + $0x58] sm:$0xff] %v1315
      %v1318 = vld [vmem:[#allocation2 + $0x14] sm:$0xff]
      %v1319 = vld [vmem:[#allocation2 + $0x1c] sm:$0xf]
      %1322 = vrot.lane.b32.xlu0 %v1318, 2
      %v1323 = vpop.permute.xlu0 %1322
      %1324 = vrot.lane.b32.xlu0 %v1319, 2
      %v1325 = vpop.permute.xlu0 %1324
      %v1326 = vrot.slane %v1323, 4
      %v1327 = vsel %vm312, %v1326, %v1323
      %v1328 = vsel %vm312, %v1326, %v1325
      %v1331 = vsel %vm459, %v1318, %v1327
      %v1332 = vsel %vm460, %v1319, %v1328
      %1333 = vrot.lane.b32.xlu0 %v1318, 126
      %v1334 = vpop.permute.xlu0 %1333
      %1335 = vrot.lane.b32.xlu0 %v1319, 126
      %v1336 = vpop.permute.xlu0 %1335
      %v1337 = vrot.slane %v1334, 4
      %v1338 = vrot.slane %v1336, 4
      %v1339 = vsel %vm338, %v1337, %v1338
      %v1340 = vsel %vm340, %v1334, %v1339
      %v1343 = vsel %vm478, %v1318, %v1340
      %v1344 = vsel %vm479, %v1319, %v1336
      %1347 = vrot.lane.b32.xlu0 %v1331, 111
      %v1348 = vpop.permute.xlu0 %1347
      %1349 = vrot.lane.b32.xlu0 %v1332, 111
      %v1350 = vpop.permute.xlu0 %1349
      %v1351 = vrot.slane %v1348, 4
      %v1352 = vrot.slane %v1350, 4
      %v1353 = vsel %vm338, %v1351, %v1352
      %v1354 = vsel %vm328, %v1348, %v1353
      %1356 = vst [vmem:[#allocation3 + $0x68] sm:$0xff] %v1354
      %1357 = vrot.lane.b32.xlu0 %v1318, 112
      %v1358 = vpop.permute.xlu0 %1357
      %1359 = vrot.lane.b32.xlu0 %v1319, 112
      %v1360 = vpop.permute.xlu0 %1359
      %v1361 = vrot.slane %v1358, 4
      %v1362 = vrot.slane %v1360, 4
      %v1363 = vsel %vm338, %v1361, %v1362
      %v1364 = vsel %vm511, %v1358, %v1363
      %1366 = vst [vmem:[#allocation3 + $0x78] sm:$0xff] %v1364
      %1369 = vrot.lane.b32.xlu0 %v1343, 113
      %v1370 = vpop.permute.xlu0 %1369
      %1371 = vrot.lane.b32.xlu0 %v1344, 113
      %v1372 = vpop.permute.xlu0 %1371
      %v1373 = vrot.slane %v1370, 4
      %v1374 = vrot.slane %v1372, 4
      %v1375 = vsel %vm338, %v1373, %v1374
      %v1376 = vsel %vm301, %v1370, %v1375
      %1378 = vst [vmem:[#allocation3 + $0x88] sm:$0xff] %v1376
      %v1379 = vld [vmem:[%s3] sm:$0xf]
      %v1380 = vld [vmem:[#allocation3] sm:$0xff]
      %v1381 = vld [vmem:[#allocation3 + $0x8] sm:$0xff]
      %v1382 = vld [vmem:[#allocation3 + $0x10] sm:$0xff]
      %v1383 = vld [vmem:[#allocation3 + $0x18] sm:$0xff]
      %v1384 = vld [vmem:[#allocation3 + $0x20] sm:$0xff]
      %v1385 = vld [vmem:[#allocation3 + $0x28] sm:$0xff]
      %v1386 = vld [vmem:[#allocation3 + $0x30] sm:$0xff]
      %v1387 = vld [vmem:[#allocation3 + $0x38] sm:$0xff]
      %v1388 = vld [vmem:[#allocation3 + $0x40] sm:$0xff]
      %v1389 = vld [vmem:[#allocation3 + $0x48] sm:$0xff]
      %v1390 = vld [vmem:[#allocation3 + $0x50] sm:$0xff]
      %v1391 = vld [vmem:[#allocation3 + $0x58] sm:$0xff]
      %v1392 = vld [vmem:[#allocation3 + $0x60] sm:$0xff]
      %v1393 = vld [vmem:[#allocation3 + $0x68] sm:$0xff]
      %v1394 = vld [vmem:[#allocation3 + $0x70] sm:$0xff]
      %v1395 = vld [vmem:[#allocation3 + $0x78] sm:$0xff]
      %v1396 = vld [vmem:[#allocation3 + $0x80] sm:$0xff]
      %v1397 = vld [vmem:[#allocation3 + $0x88] sm:$0xff]
      %v1398 = vld [vmem:[%s4] sm:$0xff]
      %1400 = vset.pattern.permute.xlu0 0
      %1401 = vperm.xlu0 %1400, %v1398
      %v1402 = vpop.permute.xlu0 %1401
      %v1422 = vunpack.c.l.b16 %v1380
      %v1423 = vunpack.c.h.b16 %v1380
      %v1424 = vunpack.c.l.b16 %v1381
      %v1425 = vunpack.c.h.b16 %v1381
      %v1426 = vunpack.c.l.b16 %v1382
      %v1427 = vunpack.c.h.b16 %v1382
      %v1428 = vunpack.c.l.b16 %v1383
      %v1429 = vunpack.c.h.b16 %v1383
      %v1430 = vunpack.c.l.b16 %v1384
      %v1431 = vunpack.c.h.b16 %v1384
      %v1432 = vunpack.c.l.b16 %v1385
      %v1433 = vunpack.c.h.b16 %v1385
      %v1434 = vunpack.c.l.b16 %v1386
      %v1435 = vunpack.c.h.b16 %v1386
      %v1436 = vunpack.c.l.b16 %v1387
      %v1437 = vunpack.c.h.b16 %v1387
      %v1438 = vunpack.c.l.b16 %v1388
      %v1439 = vunpack.c.h.b16 %v1388
      %v1440 = vunpack.c.l.b16 %v1389
      %v1441 = vunpack.c.h.b16 %v1389
      %v1442 = vunpack.c.l.b16 %v1390
      %v1443 = vunpack.c.h.b16 %v1390
      %v1444 = vunpack.c.l.b16 %v1391
      %v1445 = vunpack.c.h.b16 %v1391
      %v1446 = vunpack.c.l.b16 %v1392
      %v1447 = vunpack.c.h.b16 %v1392
      %v1448 = vunpack.c.l.b16 %v1393
      %v1449 = vunpack.c.h.b16 %v1393
      %v1450 = vunpack.c.l.b16 %v1394
      %v1451 = vunpack.c.h.b16 %v1394
      %v1452 = vunpack.c.l.b16 %v1395
      %v1453 = vunpack.c.h.b16 %v1395
      %v1454 = vunpack.c.l.b16 %v1396
      %v1455 = vunpack.c.h.b16 %v1396
      %v1456 = vunpack.c.l.b16 %v1397
      %v1457 = vunpack.c.h.b16 %v1397
      %v1458 = vpack.c.b16 %v1426, %v1422
      %v1459 = vpack.c.b16 %v1427, %v1423
      %v1460 = vpack.c.b16 %v1428, %v1424
      %v1461 = vpack.c.b16 %v1429, %v1425
      %v1462 = vpack.c.b16 %v1434, %v1430
      %v1463 = vpack.c.b16 %v1435, %v1431
      %v1464 = vpack.c.b16 %v1436, %v1432
      %v1465 = vpack.c.b16 %v1437, %v1433
      %v1466 = vpack.c.b16 %v1442, %v1438
      %v1467 = vpack.c.b16 %v1443, %v1439
      %v1468 = vpack.c.b16 %v1444, %v1440
      %v1469 = vpack.c.b16 %v1445, %v1441
      %v1470 = vpack.c.b16 %v1450, %v1446
      %v1471 = vpack.c.b16 %v1451, %v1447
      %v1472 = vpack.c.b16 %v1452, %v1448
      %v1473 = vpack.c.b16 %v1453, %v1449
      %v1474 = vpack.c.b16 %v1454, %v1454
      %v1475 = vpack.c.b16 %v1455, %v1455
      %v1476 = vpack.c.b16 %v1456, %v1456
      %v1477 = vpack.c.b16 %v1457, %v1457
      %v1495 = vsel %vm843, %v1379, 0
      %v1498 = vsel %vm847, %v1474, 0
      %v1501 = vsel %vm847, %v1475, 0
      %v1504 = vsel %vm847, %v1476, 0
      %v1507 = vsel %vm847, %v1477, 0
      %1509 = vmatprep.subr.bf16.mxu0 %v1459
      %1510 = vmatpush1.bf16.msra.mxu0 %v1458
      %1511 = vmatprep.subr.bf16.mxu0 %v1463
      %1512 = vmatpush1.bf16.msra.mxu0 %v1462
      %1513 = vmatprep.subr.bf16.mxu0 %v1467
      %1514 = vmatpush1.bf16.msra.mxu0 %v1466
      %1515 = vmatprep.subr.bf16.mxu0 %v1471
      %1516 = vmatpush1.bf16.msra.mxu0 %v1470
      %1517 = vmatprep.subr.bf16.mxu0 %v1501
      %1518 = vmatpush1.bf16.msra.mxu0 %v1498
      %1519 = vmatprep.subr.bf16.mxu0 0
      %1520 = vmatpush1.bf16.msra.mxu0 0
      %1521 = vmatprep.subr.bf16.mxu0 0
      %1522 = vmatpush1.bf16.msra.mxu0 0
      %1523 = vmatprep.subr.bf16.mxu0 0
      %1524 = vmatpush1.bf16.msra.mxu0 0
      %1525 = vmatprep.subr.bf16.mxu0 0
      %1526 = vmatpush1.bf16.msra.mxu0 0
      %1527 = vmatprep.subr.bf16.mxu0 0
      %1528 = vmatpush1.bf16.msra.mxu0 0
      %1529 = vmatprep.subr.bf16.mxu0 0
      %1530 = vmatpush1.bf16.msra.mxu0 0
      %1531 = vmatprep.subr.bf16.mxu0 0
      %1532 = vmatpush1.bf16.msra.mxu0 0
      %1533 = vmatprep.subr.bf16.mxu0 0
      %1534 = vmatpush1.bf16.msra.mxu0 0
      %1535 = vmatprep.subr.bf16.mxu0 0
      %1536 = vmatpush1.bf16.msra.mxu0 0
      %1537 = vmatprep.subr.bf16.mxu0 0
      %1538 = vmatpush1.bf16.msra.mxu0 0
      %1539 = vmatprep.subr.bf16.mxu0 0
      %1540 = vmatpush1.bf16.msra.mxu0 0
      %1541 = vmatprep.mubr.bf16.mxu0 0
      %1542 = vmatmul.mubr.bf16.gmra.mrb[0].mxu0 %v1495
      %v1543 = vpop.f32.mrb[0].mxu0
      %v1544 = vadd.f32 %v1402, %v1543
      %v1545 = vpop.f32.mrb[0].mxu0
      %v1546 = vadd.f32 %v1402, %v1545
      %v1547 = vpop.f32.mrb[0].mxu0
      %v1548 = vpop.f32.mrb[0].mxu0
      %1549 = vdwg.mxu0
      %1550 = vmatprep.subr.bf16.mxu0 %v1461
      %1551 = vmatpush1.bf16.msra.mxu0 %v1460
      %1552 = vmatprep.subr.bf16.mxu0 %v1465
      %1553 = vmatpush1.bf16.msra.mxu0 %v1464
      %1554 = vmatprep.subr.bf16.mxu0 %v1469
      %1555 = vmatpush1.bf16.msra.mxu0 %v1468
      %1556 = vmatprep.subr.bf16.mxu0 %v1473
      %1557 = vmatpush1.bf16.msra.mxu0 %v1472
      %1558 = vmatprep.subr.bf16.mxu0 %v1507
      %1559 = vmatpush1.bf16.msra.mxu0 %v1504
      %1560 = vmatprep.subr.bf16.mxu0 0
      %1561 = vmatpush1.bf16.msra.mxu0 0
      %1562 = vmatprep.subr.bf16.mxu0 0
      %1563 = vmatpush1.bf16.msra.mxu0 0
      %1564 = vmatprep.subr.bf16.mxu0 0
      %1565 = vmatpush1.bf16.msra.mxu0 0
      %1566 = vmatprep.subr.bf16.mxu0 0
      %1567 = vmatpush1.bf16.msra.mxu0 0
      %1568 = vmatprep.subr.bf16.mxu0 0
      %1569 = vmatpush1.bf16.msra.mxu0 0
      %1570 = vmatprep.subr.bf16.mxu0 0
      %1571 = vmatpush1.bf16.msra.mxu0 0
      %1572 = vmatprep.subr.bf16.mxu0 0
      %1573 = vmatpush1.bf16.msra.mxu0 0
      %1574 = vmatprep.subr.bf16.mxu0 0
      %1575 = vmatpush1.bf16.msra.mxu0 0
      %1576 = vmatprep.subr.bf16.mxu0 0
      %1577 = vmatpush1.bf16.msra.mxu0 0
      %1578 = vmatprep.subr.bf16.mxu0 0
      %1579 = vmatpush1.bf16.msra.mxu0 0
      %1580 = vmatprep.subr.bf16.mxu0 0
      %1581 = vmatpush1.bf16.msra.mxu0 0
      %1582 = vmatprep.mubr.bf16.mxu0 0
      %1583 = vmatmul.mubr.bf16.gmra.mrb[0].mxu0 %v1495
      %v1584 = vpop.f32.mrb[0].mxu0
      %v1585 = vadd.f32 %v1402, %v1584
      %v1586 = vpop.f32.mrb[0].mxu0
      %v1587 = vadd.f32 %v1402, %v1586
      %v1588 = vpop.f32.mrb[0].mxu0
      %v1589 = vpop.f32.mrb[0].mxu0
      %1590 = vdwg.mxu0
      %v1591 = vadd.f32 %v1544, %v1546
      %1592 = vadd.xlane.f32.xlu0 %v1591
      %v1593 = vpop.xlane.xlu0 %1592
      %v1594 = vmul.f32 %v1544, %v1544
      %v1595 = vmul.f32 %v1546, %v1546
      %v1596 = vadd.f32 %v1594, %v1595
      %1597 = vadd.xlane.f32.xlu0 %v1596
      %v1598 = vpop.xlane.xlu0 %1597
      %v1599 = vmul.f32 %v1593, 0.00390625
      %v1600 = vmul.f32 %v1598, 0.00390625
      %v1601 = vmul.f32 %v1599, %v1599
      %v1602 = vsub.f32 %v1600, %v1601
      %v1603 = vmax.f32 %v1602, 0.0
      %v1604 = vadd.f32 %v1603, 1e-05
      %v1605 = vrsqrt.pop %v1604
      %v1606 = vld [vmem:[%s224] sm:$0xff]
      %v1607 = vld [vmem:[%s224 + $0x8] sm:$0xff]
      %v1608 = vsub.f32 %v1544, %v1599
      %v1609 = vsub.f32 %v1546, %v1599
      %v1610 = vmul.f32 %v1608, %v1605
      %v1611 = vmul.f32 %v1609, %v1605
      %v1612 = vadd.f32 %v1606, %v1610
      %v1613 = vadd.f32 %v1607, %v1611
      %1614 = vst [vmem:[%s231] sm:$0xff] %v1612
      %1615 = vst [vmem:[%s231 + $0x8] sm:$0xff] %v1613
      %v1616 = vadd.f32 %v1585, %v1587
      %1617 = vadd.xlane.f32.xlu0 %v1616
      %v1618 = vpop.xlane.xlu0 %1617
      %v1619 = vmul.f32 %v1585, %v1585
      %v1620 = vmul.f32 %v1587, %v1587
      %v1621 = vadd.f32 %v1619, %v1620
      %1622 = vadd.xlane.f32.xlu0 %v1621
      %v1623 = vpop.xlane.xlu0 %1622
      %v1624 = vmul.f32 %v1618, 0.00390625
      %v1625 = vmul.f32 %v1623, 0.00390625
      %v1626 = vmul.f32 %v1624, %v1624
      %v1627 = vsub.f32 %v1625, %v1626
      %v1628 = vmax.f32 %v1627, 0.0
      %v1629 = vadd.f32 %v1628, 1e-05
      %v1630 = vrsqrt.pop %v1629
      %v1631 = vld [vmem:[%s527] sm:$0xff]
      %v1632 = vld [vmem:[%s527 + $0x8] sm:$0xff]
      %v1633 = vsub.f32 %v1585, %v1624
      %v1634 = vsub.f32 %v1587, %v1624
      %v1635 = vmul.f32 %v1633, %v1630
      %v1636 = vmul.f32 %v1634, %v1630
      %v1637 = vadd.f32 %v1631, %v1635
      %v1638 = vadd.f32 %v1632, %v1636
      %s1639 = scalar_lea.vmem %s231, 16
      %1640 = vst [vmem:[%s1639] sm:$0xff] %v1637
      %1641 = vst [vmem:[%s1639 + $0x8] sm:$0xff] %v1638
      %s1642 = smul.u32 2, %s16
      %p1643 = scmp.lt.s32.totalorder %s1642, 3
      %s1644 = scalar_select %p1643, %s1642, 3
      %s1645 = smul.addr %s1644, 2
      %s1646 = smul.addr %s1645, 8
      %s1647 = scalar_lea.vmem %s5, %s1646
      // Predicated region
      $region41: #{residual_block.1} parent=39 // pred_check
        %p1648 = pneg %p144
      $region42: #{residual_block.1} parent=39 // pred_check_branch
        %1650 = sbr.rel (%p1648) target = $region44
      $region43: #{residual_block.1} parent=39 // pred_region
        %s1651 = smul.u32 2, %s16
      $region44: #{residual_block.1} parent=39 // pred_fallthru
        _
    $region40: #{residual_block.1} parent=5 // pred_fallthru
      _
    %p1652 = scmp.le.s32.totalorder 2, %s11
    // Predicated region
    $region45: #{residual_block.1} parent=5 // pred_check
      %p1653 = pneg %p1652
    $region46: #{residual_block.1} parent=5 // pred_check_branch
      %1655 = sbr.rel (%p1653) target = $region48
    $region47: #{residual_block.1} parent=5 // pred_region
      %s1656 = ssub.s32 %s11, 2
      // Predicated region
      $region49: #{residual_block.1} parent=47 // pred_check
        %p1657 = pneg %p150
      $region50: #{residual_block.1} parent=47 // pred_check_branch
        %1659 = sbr.rel (%p1657) target = $region52
      $region51: #{residual_block.1} parent=47 // pred_region
        %s1660 = smul.u32 2, %s17
        %p1661 = scmp.lt.s32.totalorder %s1660, 3
        %s1662 = scalar_select %p1661, %s1660, 3
        %s1663 = smul.addr %s1662, 2
        %s1664 = smul.addr %s1663, 8
        %s1665 = scalar_lea.vmem %s5, %s1664
      $region52: #{residual_block.1} parent=47 // pred_fallthru
        _
    $region48: #{residual_block.1} parent=5 // pred_fallthru
      _
  $region6: #{residual_block.1} parent=0 // loop_footer
    %s15 = sadd.s32 1, %s11
  $region7: #{residual_block.1} parent=0 // loop_footer_branch
    %10 = sbr.rel target = $region3
  $region8: #{residual_block.1} parent=0 // loop_exit
    _

</llo_original>
